<compile_context>
chip_gen: v5e
topology: v5e:2x2
jax: 0.10.0
libtpu: 0.0.40
codegen_flags: <defaults>
</compile_context>

<pallas_src>
import jax
import jax.numpy as jnp
from jax.experimental import pallas as pl
from jax.experimental.pallas import tpu as pltpu

LAYER_DIMS = [3, 50, 200, 500, 300, 200, 100, 80, 30, 3]
NEG_SLOPE = 0.01  # torch.nn.LeakyReLU default negative_slope
FIN = LAYER_DIMS[0]
FOUT = LAYER_DIMS[-1]
LANE = 128
SUBLANE = 8


def _pad_to(n, m):
    return ((n + m - 1) // m) * m


def _choose_tb(B, tb):
    """Pick the effective batch tile.

    Maximize the tile (amortizes the ~0.35us/step grid overhead and the MXU
    re-push of the 9-layer chain), but keep >= 2 grid steps for large batches
    so v7x's two TensorCores both get work (harmless on v5e/v6e).
    """
    B_sub = _pad_to(max(B, 1), SUBLANE)
    tb_eff = min(_pad_to(tb, SUBLANE), B_sub)
    if B_sub >= 2 * 256 and tb_eff >= B_sub:
        tb_eff = _pad_to((B_sub + 1) // 2, 256)
    return tb_eff


def mlp_kernel(x_ref, w0_ref, b0_ref, *refs):
    """Whole forward pass for one batch tile; weights resident in VMEM."""
    out_ref = refs[-1]            # (tb, 3) f32
    param_refs = refs[:-1]        # alternating (w bf16, b f32), layers 1..8
    n_mxu_layers = len(param_refs) // 2

    x = x_ref[...]                # (tb, 3) f32, narrow input tile

    # Layer 0 (3 -> 50, padded to 128 lanes) on the VPU: 3-term outer product.
    # Avoids a 97%-zero MXU pass and the (tb,128) widening scratch entirely.
    h = (x[:, 0:1] * w0_ref[0:1, :]
         + x[:, 1:2] * w0_ref[1:2, :]
         + x[:, 2:3] * w0_ref[2:3, :]
         + b0_ref[...])                           # (tb, 128) f32
    h = jnp.maximum(h, NEG_SLOPE * h)             # LeakyReLU (2 VPU ops)

    # Layers 1..8 on the MXU: bf16 operands, f32 accumulation.
    for li in range(n_mxu_layers):
        w = param_refs[2 * li][...]               # (fi_p, fo_p) bf16
        b = param_refs[2 * li + 1][...]           # (1, fo_p)   f32
        h = jnp.dot(h.astype(jnp.bfloat16), w,
                    preferred_element_type=jnp.float32) + b
        if li < n_mxu_layers - 1:                 # no activation after last
            h = jnp.maximum(h, NEG_SLOPE * h)

    out_ref[...] = h[:, :FOUT]                    # narrow (tb, 3) writeback


def init_params(key):
    """PyTorch-default-style init: U(-1/sqrt(fan_in), +1/sqrt(fan_in))."""
    params = []
    for fi, fo in zip(LAYER_DIMS[:-1], LAYER_DIMS[1:]):
        key, kw, kb = jax.random.split(key, 3)
        bound = 1.0 / (fi ** 0.5)
        w = jax.random.uniform(kw, (fi, fo), jnp.float32, -bound, bound)
        b = jax.random.uniform(kb, (fo,), jnp.float32, -bound, bound)
        params.append((w, b))
    return params


def prepare_params(params):
    """One-time pad / cast of the per-layer (w, b) list for the kernel.

    Layer 0 stays f32 (rows padded to 128 lanes) for the in-kernel VPU outer
    product; layers 1..8 are zero-padded to 128-multiples, weights cast to
    bf16, biases kept f32.  Call once; reuse the result across forward calls.
    """
    (w0, b0) = params[0]
    fo0 = w0.shape[1]
    fo0_p = _pad_to(fo0, LANE)
    w0_p = jnp.zeros((FIN, fo0_p), jnp.float32).at[:, :fo0].set(
        w0.astype(jnp.float32))
    b0_p = jnp.zeros((1, fo0_p), jnp.float32).at[0, :fo0].set(
        b0.astype(jnp.float32))
    flat = [w0_p, b0_p]
    for (w, b) in params[1:]:
        fi, fo = w.shape
        fi_p, fo_p = _pad_to(fi, LANE), _pad_to(fo, LANE)
        w_p = jnp.zeros((fi_p, fo_p), jnp.bfloat16).at[:fi, :fo].set(
            w.astype(jnp.bfloat16))
        b_p = jnp.zeros((1, fo_p), jnp.float32).at[0, :fo].set(
            b.astype(jnp.float32))
        flat += [w_p, b_p]
    return tuple(flat)


def mlp_forward(x, prepped, *, tb=1024):
    """x: (B, 3) f32.  prepped: output of prepare_params().  Returns (B, 3)."""
    B, fin = x.shape
    assert fin == FIN

    tb_eff = _choose_tb(B, tb)
    B_pad = _pad_to(B, tb_eff)

    # Input stays narrow in HBM: (B_pad, 3); lane dim == full array dim, so
    # the (8,128) block constraint is satisfied at 12 bytes/row of DMA.
    x_p = jnp.pad(x.astype(jnp.float32), ((0, B_pad - B), (0, 0)))

    in_specs = [pl.BlockSpec((tb_eff, FIN), lambda i: (i, 0))]
    flops = 0
    bytes_accessed = B_pad * FIN * 4 + B_pad * FOUT * 4
    for p in prepped:
        r, c = p.shape
        # Constant index_map -> fetched once, resident across the batch grid.
        in_specs.append(pl.BlockSpec((r, c), lambda i: (0, 0)))
        bytes_accessed += p.size * p.dtype.itemsize
        if p.dtype == jnp.bfloat16:
            flops += 2 * B_pad * r * c

    out = pl.pallas_call(
        mlp_kernel,
        grid=(B_pad // tb_eff,),
        in_specs=in_specs,
        out_specs=pl.BlockSpec((tb_eff, FOUT), lambda i: (i, 0)),
        out_shape=jax.ShapeDtypeStruct((B_pad, FOUT), jnp.float32),
        compiler_params=pltpu.CompilerParams(
            dimension_semantics=("parallel",),
            vmem_limit_bytes=32 << 20),
        cost_estimate=pl.CostEstimate(
            flops=flops, transcendentals=0, bytes_accessed=bytes_accessed),
    )(x_p, *prepped)

    return out[:B]


def mlp_reference(x, params):
    h = x
    for li, (w, b) in enumerate(params):
        h = h @ w + b
        if li < len(params) - 1:
            h = jnp.where(h >= 0.0, h, NEG_SLOPE * h)
    return h


if __name__ == "__main__":
    key = jax.random.PRNGKey(0)
    k_param, k_x = jax.random.split(key)

    params = init_params(k_param)
    prepped = prepare_params(params)          # one-time weight prep
    x = jax.random.normal(k_x, (8, 3), jnp.float32)  # (batch=8, features=3)

    y = jax.block_until_ready(mlp_forward(x, prepped))
    y_ref = mlp_reference(x, params)

    assert y.shape == (8, 3)
    # bf16 operands in the 8 MXU layers (f32 accumulation) -> relative check.
    rel_err = jnp.max(jnp.abs(y - y_ref)) / (jnp.max(jnp.abs(y_ref)) + 1e-6)
    assert rel_err < 2e-2, f"mismatch vs reference: rel_err={rel_err}"

    print("KERNEL_OK")
</pallas_src>

<mosaic_0001>
module attributes {stable_mosaic.version = 11 : i64} {
  func.func @mlp_kernel(%arg0: i32, %arg1: memref<8x3xf32, #tpu.memory_space<vmem>>, %arg2: memref<3x128xf32, #tpu.memory_space<vmem>>, %arg3: memref<1x128xf32, #tpu.memory_space<vmem>>, %arg4: memref<128x256xbf16, #tpu.memory_space<vmem>>, %arg5: memref<1x256xf32, #tpu.memory_space<vmem>>, %arg6: memref<256x512xbf16, #tpu.memory_space<vmem>>, %arg7: memref<1x512xf32, #tpu.memory_space<vmem>>, %arg8: memref<512x384xbf16, #tpu.memory_space<vmem>>, %arg9: memref<1x384xf32, #tpu.memory_space<vmem>>, %arg10: memref<384x256xbf16, #tpu.memory_space<vmem>>, %arg11: memref<1x256xf32, #tpu.memory_space<vmem>>, %arg12: memref<256x128xbf16, #tpu.memory_space<vmem>>, %arg13: memref<1x128xf32, #tpu.memory_space<vmem>>, %arg14: memref<128x128xbf16, #tpu.memory_space<vmem>>, %arg15: memref<1x128xf32, #tpu.memory_space<vmem>>, %arg16: memref<128x128xbf16, #tpu.memory_space<vmem>>, %arg17: memref<1x128xf32, #tpu.memory_space<vmem>>, %arg18: memref<128x128xbf16, #tpu.memory_space<vmem>>, %arg19: memref<1x128xf32, #tpu.memory_space<vmem>>, %arg20: memref<8x3xf32, #tpu.memory_space<vmem>>) attributes {dimension_semantics = [#tpu.dimension_semantics<parallel>], iteration_bounds = array<i64: 1>, scalar_prefetch = 0 : i64, scratch_operands = 0 : i64, tpu.core_type = #tpu.core_type<tc>, window_params = [{transform_indices = @transform_0, window_bounds = array<i64: 8, 3>}, {pipeline_mode = #tpu.pipeline_mode<synchronous>, transform_indices = @transform_1, window_bounds = array<i64: 3, 128>}, {pipeline_mode = #tpu.pipeline_mode<synchronous>, transform_indices = @transform_2, window_bounds = array<i64: 1, 128>}, {pipeline_mode = #tpu.pipeline_mode<synchronous>, transform_indices = @transform_3, window_bounds = array<i64: 128, 256>}, {pipeline_mode = #tpu.pipeline_mode<synchronous>, transform_indices = @transform_4, window_bounds = array<i64: 1, 256>}, {pipeline_mode = #tpu.pipeline_mode<synchronous>, transform_indices = @transform_5, window_bounds = array<i64: 256, 512>}, {pipeline_mode = #tpu.pipeline_mode<synchronous>, transform_indices = @transform_6, window_bounds = array<i64: 1, 512>}, {pipeline_mode = #tpu.pipeline_mode<synchronous>, transform_indices = @transform_7, window_bounds = array<i64: 512, 384>}, {pipeline_mode = #tpu.pipeline_mode<synchronous>, transform_indices = @transform_8, window_bounds = array<i64: 1, 384>}, {pipeline_mode = #tpu.pipeline_mode<synchronous>, transform_indices = @transform_9, window_bounds = array<i64: 384, 256>}, {pipeline_mode = #tpu.pipeline_mode<synchronous>, transform_indices = @transform_10, window_bounds = array<i64: 1, 256>}, {pipeline_mode = #tpu.pipeline_mode<synchronous>, transform_indices = @transform_11, window_bounds = array<i64: 256, 128>}, {pipeline_mode = #tpu.pipeline_mode<synchronous>, transform_indices = @transform_12, window_bounds = array<i64: 1, 128>}, {pipeline_mode = #tpu.pipeline_mode<synchronous>, transform_indices = @transform_13, window_bounds = array<i64: 128, 128>}, {pipeline_mode = #tpu.pipeline_mode<synchronous>, transform_indices = @transform_14, window_bounds = array<i64: 1, 128>}, {pipeline_mode = #tpu.pipeline_mode<synchronous>, transform_indices = @transform_15, window_bounds = array<i64: 128, 128>}, {pipeline_mode = #tpu.pipeline_mode<synchronous>, transform_indices = @transform_16, window_bounds = array<i64: 1, 128>}, {pipeline_mode = #tpu.pipeline_mode<synchronous>, transform_indices = @transform_17, window_bounds = array<i64: 128, 128>}, {pipeline_mode = #tpu.pipeline_mode<synchronous>, transform_indices = @transform_18, window_bounds = array<i64: 1, 128>}, {transform_indices = @transform_19, window_bounds = array<i64: 8, 3>}]} {
    %c0 = arith.constant 0 : index
    %c0_0 = arith.constant 0 : index
    %0 = vector.load %arg1[%c0, %c0_0] : memref<8x3xf32, #tpu.memory_space<vmem>>, vector<8x3xf32>
    %1 = vector.extract_strided_slice %0 {offsets = [0, 0], sizes = [8, 1], strides = [1, 1]} : vector<8x3xf32> to vector<8x1xf32>
    %c0_1 = arith.constant 0 : index
    %c0_2 = arith.constant 0 : index
    %2 = vector.load %arg2[%c0_1, %c0_2] : memref<3x128xf32, #tpu.memory_space<vmem>>, vector<1x128xf32>
    %3 = vector.broadcast %1 : vector<8x1xf32> to vector<8x128xf32>
    %4 = vector.broadcast %2 : vector<1x128xf32> to vector<8x128xf32>
    %5 = arith.mulf %3, %4 : vector<8x128xf32>
    %6 = vector.extract_strided_slice %0 {offsets = [0, 1], sizes = [8, 1], strides = [1, 1]} : vector<8x3xf32> to vector<8x1xf32>
    %c1 = arith.constant 1 : index
    %c0_3 = arith.constant 0 : index
    %7 = vector.load %arg2[%c1, %c0_3] : memref<3x128xf32, #tpu.memory_space<vmem>>, vector<1x128xf32>
    %8 = vector.broadcast %6 : vector<8x1xf32> to vector<8x128xf32>
    %9 = vector.broadcast %7 : vector<1x128xf32> to vector<8x128xf32>
    %10 = arith.mulf %8, %9 : vector<8x128xf32>
    %11 = arith.addf %5, %10 : vector<8x128xf32>
    %12 = vector.extract_strided_slice %0 {offsets = [0, 2], sizes = [8, 1], strides = [1, 1]} : vector<8x3xf32> to vector<8x1xf32>
    %c2 = arith.constant 2 : index
    %c0_4 = arith.constant 0 : index
    %13 = vector.load %arg2[%c2, %c0_4] : memref<3x128xf32, #tpu.memory_space<vmem>>, vector<1x128xf32>
    %14 = vector.broadcast %12 : vector<8x1xf32> to vector<8x128xf32>
    %15 = vector.broadcast %13 : vector<1x128xf32> to vector<8x128xf32>
    %16 = arith.mulf %14, %15 : vector<8x128xf32>
    %17 = arith.addf %11, %16 : vector<8x128xf32>
    %c0_5 = arith.constant 0 : index
    %c0_6 = arith.constant 0 : index
    %18 = vector.load %arg3[%c0_5, %c0_6] : memref<1x128xf32, #tpu.memory_space<vmem>>, vector<1x128xf32>
    %19 = vector.broadcast %18 : vector<1x128xf32> to vector<8x128xf32>
    %20 = arith.addf %17, %19 : vector<8x128xf32>
    %cst = arith.constant 0.00999999977 : f32
    %21 = vector.broadcast %cst : f32 to vector<8x128xf32>
    %22 = arith.mulf %21, %20 : vector<8x128xf32>
    %23 = arith.maximumf %20, %22 : vector<8x128xf32>
    %c0_7 = arith.constant 0 : index
    %c0_8 = arith.constant 0 : index
    %24 = vector.load %arg4[%c0_7, %c0_8] : memref<128x256xbf16, #tpu.memory_space<vmem>>, vector<128x256xbf16>
    %c0_9 = arith.constant 0 : index
    %c0_10 = arith.constant 0 : index
    %25 = vector.load %arg5[%c0_9, %c0_10] : memref<1x256xf32, #tpu.memory_space<vmem>>, vector<1x256xf32>
    %26 = arith.truncf %23 : vector<8x128xf32> to vector<8x128xbf16>
    %cst_11 = arith.constant dense<0.000000e+00> : vector<8x256xf32>
    %27 = tpu.matmul %26, %24, %cst_11 {dimension_numbers = #tpu.dot_dimension_numbers<[1], [0], [0], [1], [0, 0, 1, 1], [], []>} : vector<8x128xbf16>, vector<128x256xbf16>, vector<8x256xf32> -> vector<8x256xf32>
    %28 = vector.broadcast %25 : vector<1x256xf32> to vector<8x256xf32>
    %29 = arith.addf %27, %28 : vector<8x256xf32>
    %cst_12 = arith.constant 0.00999999977 : f32
    %30 = vector.broadcast %cst_12 : f32 to vector<8x256xf32>
    %31 = arith.mulf %30, %29 : vector<8x256xf32>
    %32 = arith.maximumf %29, %31 : vector<8x256xf32>
    %c0_13 = arith.constant 0 : index
    %c0_14 = arith.constant 0 : index
    %33 = vector.load %arg6[%c0_13, %c0_14] : memref<256x512xbf16, #tpu.memory_space<vmem>>, vector<256x512xbf16>
    %c0_15 = arith.constant 0 : index
    %c0_16 = arith.constant 0 : index
    %34 = vector.load %arg7[%c0_15, %c0_16] : memref<1x512xf32, #tpu.memory_space<vmem>>, vector<1x512xf32>
    %35 = arith.truncf %32 : vector<8x256xf32> to vector<8x256xbf16>
    %cst_17 = arith.constant dense<0.000000e+00> : vector<8x512xf32>
    %36 = tpu.matmul %35, %33, %cst_17 {dimension_numbers = #tpu.dot_dimension_numbers<[1], [0], [0], [1], [0, 0, 1, 1], [], []>} : vector<8x256xbf16>, vector<256x512xbf16>, vector<8x512xf32> -> vector<8x512xf32>
    %37 = vector.broadcast %34 : vector<1x512xf32> to vector<8x512xf32>
    %38 = arith.addf %36, %37 : vector<8x512xf32>
    %cst_18 = arith.constant 0.00999999977 : f32
    %39 = vector.broadcast %cst_18 : f32 to vector<8x512xf32>
    %40 = arith.mulf %39, %38 : vector<8x512xf32>
    %41 = arith.maximumf %38, %40 : vector<8x512xf32>
    %c0_19 = arith.constant 0 : index
    %c0_20 = arith.constant 0 : index
    %42 = vector.load %arg8[%c0_19, %c0_20] : memref<512x384xbf16, #tpu.memory_space<vmem>>, vector<512x384xbf16>
    %c0_21 = arith.constant 0 : index
    %c0_22 = arith.constant 0 : index
    %43 = vector.load %arg9[%c0_21, %c0_22] : memref<1x384xf32, #tpu.memory_space<vmem>>, vector<1x384xf32>
    %44 = arith.truncf %41 : vector<8x512xf32> to vector<8x512xbf16>
    %cst_23 = arith.constant dense<0.000000e+00> : vector<8x384xf32>
    %45 = tpu.matmul %44, %42, %cst_23 {dimension_numbers = #tpu.dot_dimension_numbers<[1], [0], [0], [1], [0, 0, 1, 1], [], []>} : vector<8x512xbf16>, vector<512x384xbf16>, vector<8x384xf32> -> vector<8x384xf32>
    %46 = vector.broadcast %43 : vector<1x384xf32> to vector<8x384xf32>
    %47 = arith.addf %45, %46 : vector<8x384xf32>
    %cst_24 = arith.constant 0.00999999977 : f32
    %48 = vector.broadcast %cst_24 : f32 to vector<8x384xf32>
    %49 = arith.mulf %48, %47 : vector<8x384xf32>
    %50 = arith.maximumf %47, %49 : vector<8x384xf32>
    %c0_25 = arith.constant 0 : index
    %c0_26 = arith.constant 0 : index
    %51 = vector.load %arg10[%c0_25, %c0_26] : memref<384x256xbf16, #tpu.memory_space<vmem>>, vector<384x256xbf16>
    %c0_27 = arith.constant 0 : index
    %c0_28 = arith.constant 0 : index
    %52 = vector.load %arg11[%c0_27, %c0_28] : memref<1x256xf32, #tpu.memory_space<vmem>>, vector<1x256xf32>
    %53 = arith.truncf %50 : vector<8x384xf32> to vector<8x384xbf16>
    %cst_29 = arith.constant dense<0.000000e+00> : vector<8x256xf32>
    %54 = tpu.matmul %53, %51, %cst_29 {dimension_numbers = #tpu.dot_dimension_numbers<[1], [0], [0], [1], [0, 0, 1, 1], [], []>} : vector<8x384xbf16>, vector<384x256xbf16>, vector<8x256xf32> -> vector<8x256xf32>
    %55 = vector.broadcast %52 : vector<1x256xf32> to vector<8x256xf32>
    %56 = arith.addf %54, %55 : vector<8x256xf32>
    %cst_30 = arith.constant 0.00999999977 : f32
    %57 = vector.broadcast %cst_30 : f32 to vector<8x256xf32>
    %58 = arith.mulf %57, %56 : vector<8x256xf32>
    %59 = arith.maximumf %56, %58 : vector<8x256xf32>
    %c0_31 = arith.constant 0 : index
    %c0_32 = arith.constant 0 : index
    %60 = vector.load %arg12[%c0_31, %c0_32] : memref<256x128xbf16, #tpu.memory_space<vmem>>, vector<256x128xbf16>
    %c0_33 = arith.constant 0 : index
    %c0_34 = arith.constant 0 : index
    %61 = vector.load %arg13[%c0_33, %c0_34] : memref<1x128xf32, #tpu.memory_space<vmem>>, vector<1x128xf32>
    %62 = arith.truncf %59 : vector<8x256xf32> to vector<8x256xbf16>
    %cst_35 = arith.constant dense<0.000000e+00> : vector<8x128xf32>
    %63 = tpu.matmul %62, %60, %cst_35 {dimension_numbers = #tpu.dot_dimension_numbers<[1], [0], [0], [1], [0, 0, 1, 1], [], []>} : vector<8x256xbf16>, vector<256x128xbf16>, vector<8x128xf32> -> vector<8x128xf32>
    %64 = vector.broadcast %61 : vector<1x128xf32> to vector<8x128xf32>
    %65 = arith.addf %63, %64 : vector<8x128xf32>
    %cst_36 = arith.constant 0.00999999977 : f32
    %66 = vector.broadcast %cst_36 : f32 to vector<8x128xf32>
    %67 = arith.mulf %66, %65 : vector<8x128xf32>
    %68 = arith.maximumf %65, %67 : vector<8x128xf32>
    %c0_37 = arith.constant 0 : index
    %c0_38 = arith.constant 0 : index
    %69 = vector.load %arg14[%c0_37, %c0_38] : memref<128x128xbf16, #tpu.memory_space<vmem>>, vector<128x128xbf16>
    %c0_39 = arith.constant 0 : index
    %c0_40 = arith.constant 0 : index
    %70 = vector.load %arg15[%c0_39, %c0_40] : memref<1x128xf32, #tpu.memory_space<vmem>>, vector<1x128xf32>
    %71 = arith.truncf %68 : vector<8x128xf32> to vector<8x128xbf16>
    %cst_41 = arith.constant dense<0.000000e+00> : vector<8x128xf32>
    %72 = tpu.matmul %71, %69, %cst_41 {dimension_numbers = #tpu.dot_dimension_numbers<[1], [0], [0], [1], [0, 0, 1, 1], [], []>} : vector<8x128xbf16>, vector<128x128xbf16>, vector<8x128xf32> -> vector<8x128xf32>
    %73 = vector.broadcast %70 : vector<1x128xf32> to vector<8x128xf32>
    %74 = arith.addf %72, %73 : vector<8x128xf32>
    %cst_42 = arith.constant 0.00999999977 : f32
    %75 = vector.broadcast %cst_42 : f32 to vector<8x128xf32>
    %76 = arith.mulf %75, %74 : vector<8x128xf32>
    %77 = arith.maximumf %74, %76 : vector<8x128xf32>
    %c0_43 = arith.constant 0 : index
    %c0_44 = arith.constant 0 : index
    %78 = vector.load %arg16[%c0_43, %c0_44] : memref<128x128xbf16, #tpu.memory_space<vmem>>, vector<128x128xbf16>
    %c0_45 = arith.constant 0 : index
    %c0_46 = arith.constant 0 : index
    %79 = vector.load %arg17[%c0_45, %c0_46] : memref<1x128xf32, #tpu.memory_space<vmem>>, vector<1x128xf32>
    %80 = arith.truncf %77 : vector<8x128xf32> to vector<8x128xbf16>
    %cst_47 = arith.constant dense<0.000000e+00> : vector<8x128xf32>
    %81 = tpu.matmul %80, %78, %cst_47 {dimension_numbers = #tpu.dot_dimension_numbers<[1], [0], [0], [1], [0, 0, 1, 1], [], []>} : vector<8x128xbf16>, vector<128x128xbf16>, vector<8x128xf32> -> vector<8x128xf32>
    %82 = vector.broadcast %79 : vector<1x128xf32> to vector<8x128xf32>
    %83 = arith.addf %81, %82 : vector<8x128xf32>
    %cst_48 = arith.constant 0.00999999977 : f32
    %84 = vector.broadcast %cst_48 : f32 to vector<8x128xf32>
    %85 = arith.mulf %84, %83 : vector<8x128xf32>
    %86 = arith.maximumf %83, %85 : vector<8x128xf32>
    %c0_49 = arith.constant 0 : index
    %c0_50 = arith.constant 0 : index
    %87 = vector.load %arg18[%c0_49, %c0_50] : memref<128x128xbf16, #tpu.memory_space<vmem>>, vector<128x128xbf16>
    %c0_51 = arith.constant 0 : index
    %c0_52 = arith.constant 0 : index
    %88 = vector.load %arg19[%c0_51, %c0_52] : memref<1x128xf32, #tpu.memory_space<vmem>>, vector<1x128xf32>
    %89 = arith.truncf %86 : vector<8x128xf32> to vector<8x128xbf16>
    %cst_53 = arith.constant dense<0.000000e+00> : vector<8x128xf32>
    %90 = tpu.matmul %89, %87, %cst_53 {dimension_numbers = #tpu.dot_dimension_numbers<[1], [0], [0], [1], [0, 0, 1, 1], [], []>} : vector<8x128xbf16>, vector<128x128xbf16>, vector<8x128xf32> -> vector<8x128xf32>
    %91 = vector.broadcast %88 : vector<1x128xf32> to vector<8x128xf32>
    %92 = arith.addf %90, %91 : vector<8x128xf32>
    %93 = vector.extract_strided_slice %92 {offsets = [0, 0], sizes = [8, 3], strides = [1, 1]} : vector<8x128xf32> to vector<8x3xf32>
    %c0_54 = arith.constant 0 : index
    %c0_55 = arith.constant 0 : index
    %94 = vector.load %arg20[%c0_54, %c0_55] : memref<8x3xf32, #tpu.memory_space<vmem>>, vector<8x3xf32>
    tpu.vector_store %arg20[%c0_54, %c0_55], %93 {strides = array<i32>} : memref<8x3xf32, #tpu.memory_space<vmem>>, vector<8x3xf32>,
    return
  }
  func.func @transform_0(%arg0: i32) -> (i32, i32) {
    %c0_i32 = arith.constant 0 : i32
    %c0_i32_0 = arith.constant 0 : i32
    return %arg0, %c0_i32 : i32, i32
  }
  func.func @transform_1(%arg0: i32) -> (i32, i32) {
    %c0_i32 = arith.constant 0 : i32
    %c0_i32_0 = arith.constant 0 : i32
    %c0_i32_1 = arith.constant 0 : i32
    return %c0_i32, %c0_i32_0 : i32, i32
  }
  func.func @transform_2(%arg0: i32) -> (i32, i32) {
    %c0_i32 = arith.constant 0 : i32
    %c0_i32_0 = arith.constant 0 : i32
    %c0_i32_1 = arith.constant 0 : i32
    return %c0_i32, %c0_i32_0 : i32, i32
  }
  func.func @transform_3(%arg0: i32) -> (i32, i32) {
    %c0_i32 = arith.constant 0 : i32
    %c0_i32_0 = arith.constant 0 : i32
    %c0_i32_1 = arith.constant 0 : i32
    return %c0_i32, %c0_i32_0 : i32, i32
  }
  func.func @transform_4(%arg0: i32) -> (i32, i32) {
    %c0_i32 = arith.constant 0 : i32
    %c0_i32_0 = arith.constant 0 : i32
    %c0_i32_1 = arith.constant 0 : i32
    return %c0_i32, %c0_i32_0 : i32, i32
  }
  func.func @transform_5(%arg0: i32) -> (i32, i32) {
    %c0_i32 = arith.constant 0 : i32
    %c0_i32_0 = arith.constant 0 : i32
    %c0_i32_1 = arith.constant 0 : i32
    return %c0_i32, %c0_i32_0 : i32, i32
  }
  func.func @transform_6(%arg0: i32) -> (i32, i32) {
    %c0_i32 = arith.constant 0 : i32
    %c0_i32_0 = arith.constant 0 : i32
    %c0_i32_1 = arith.constant 0 : i32
    return %c0_i32, %c0_i32_0 : i32, i32
  }
  func.func @transform_7(%arg0: i32) -> (i32, i32) {
    %c0_i32 = arith.constant 0 : i32
    %c0_i32_0 = arith.constant 0 : i32
    %c0_i32_1 = arith.constant 0 : i32
    return %c0_i32, %c0_i32_0 : i32, i32
  }
  func.func @transform_8(%arg0: i32) -> (i32, i32) {
    %c0_i32 = arith.constant 0 : i32
    %c0_i32_0 = arith.constant 0 : i32
    %c0_i32_1 = arith.constant 0 : i32
    return %c0_i32, %c0_i32_0 : i32, i32
  }
  func.func @transform_9(%arg0: i32) -> (i32, i32) {
    %c0_i32 = arith.constant 0 : i32
    %c0_i32_0 = arith.constant 0 : i32
    %c0_i32_1 = arith.constant 0 : i32
    return %c0_i32, %c0_i32_0 : i32, i32
  }
  func.func @transform_10(%arg0: i32) -> (i32, i32) {
    %c0_i32 = arith.constant 0 : i32
    %c0_i32_0 = arith.constant 0 : i32
    %c0_i32_1 = arith.constant 0 : i32
    return %c0_i32, %c0_i32_0 : i32, i32
  }
  func.func @transform_11(%arg0: i32) -> (i32, i32) {
    %c0_i32 = arith.constant 0 : i32
    %c0_i32_0 = arith.constant 0 : i32
    %c0_i32_1 = arith.constant 0 : i32
    return %c0_i32, %c0_i32_0 : i32, i32
  }
  func.func @transform_12(%arg0: i32) -> (i32, i32) {
    %c0_i32 = arith.constant 0 : i32
    %c0_i32_0 = arith.constant 0 : i32
    %c0_i32_1 = arith.constant 0 : i32
    return %c0_i32, %c0_i32_0 : i32, i32
  }
  func.func @transform_13(%arg0: i32) -> (i32, i32) {
    %c0_i32 = arith.constant 0 : i32
    %c0_i32_0 = arith.constant 0 : i32
    %c0_i32_1 = arith.constant 0 : i32
    return %c0_i32, %c0_i32_0 : i32, i32
  }
  func.func @transform_14(%arg0: i32) -> (i32, i32) {
    %c0_i32 = arith.constant 0 : i32
    %c0_i32_0 = arith.constant 0 : i32
    %c0_i32_1 = arith.constant 0 : i32
    return %c0_i32, %c0_i32_0 : i32, i32
  }
  func.func @transform_15(%arg0: i32) -> (i32, i32) {
    %c0_i32 = arith.constant 0 : i32
    %c0_i32_0 = arith.constant 0 : i32
    %c0_i32_1 = arith.constant 0 : i32
    return %c0_i32, %c0_i32_0 : i32, i32
  }
  func.func @transform_16(%arg0: i32) -> (i32, i32) {
    %c0_i32 = arith.constant 0 : i32
    %c0_i32_0 = arith.constant 0 : i32
    %c0_i32_1 = arith.constant 0 : i32
    return %c0_i32, %c0_i32_0 : i32, i32
  }
  func.func @transform_17(%arg0: i32) -> (i32, i32) {
    %c0_i32 = arith.constant 0 : i32
    %c0_i32_0 = arith.constant 0 : i32
    %c0_i32_1 = arith.constant 0 : i32
    return %c0_i32, %c0_i32_0 : i32, i32
  }
  func.func @transform_18(%arg0: i32) -> (i32, i32) {
    %c0_i32 = arith.constant 0 : i32
    %c0_i32_0 = arith.constant 0 : i32
    %c0_i32_1 = arith.constant 0 : i32
    return %c0_i32, %c0_i32_0 : i32, i32
  }
  func.func @transform_19(%arg0: i32) -> (i32, i32) {
    %c0_i32 = arith.constant 0 : i32
    %c0_i32_0 = arith.constant 0 : i32
    return %arg0, %c0_i32 : i32, i32
  }
}

</mosaic_0001>

<llo_original>
// kernel: tpu_custom_call.1
$region0: #{tpu_custom_call.1}
  #allocation0 [shape = 'u32[]', space=smem, size = 0x4, offset = 0x4, fixed_abs, tag = 'smem constant byte address 0x4 - core index']
  #allocation1 [shape = 'u32[72,128]{1,0:T(1,128)}', space=vmem, size = 0x9000, scoped, tag = 'internal scratch']
  %s0 = inlined_call_operand.vmem [shape: f32[8,3], index: 0, kind: input, shape index: {}]
  %s1 = inlined_call_operand.vmem [shape: f32[3,128], index: 1, kind: input, shape index: {}]
  %s2 = inlined_call_operand.hbm [shape: f32[1,128], index: 2, kind: input, shape index: {}]
  %s3 = inlined_call_operand.hbm [shape: bf16[128,256], index: 3, kind: input, shape index: {}]
  %s4 = inlined_call_operand.vmem [shape: f32[1,256], index: 4, kind: input, shape index: {}]
  %s5 = inlined_call_operand.hbm [shape: bf16[256,512], index: 5, kind: input, shape index: {}]
  %s6 = inlined_call_operand.vmem [shape: f32[1,512], index: 6, kind: input, shape index: {}]
  %s7 = inlined_call_operand.hbm [shape: bf16[512,384], index: 7, kind: input, shape index: {}]
  %s8 = inlined_call_operand.vmem [shape: f32[1,384], index: 8, kind: input, shape index: {}]
  %s9 = inlined_call_operand.hbm [shape: bf16[384,256], index: 9, kind: input, shape index: {}]
  %s10 = inlined_call_operand.vmem [shape: f32[1,256], index: 10, kind: input, shape index: {}]
  %s11 = inlined_call_operand.hbm [shape: bf16[256,128], index: 11, kind: input, shape index: {}]
  %s12 = inlined_call_operand.vmem [shape: f32[1,128], index: 12, kind: input, shape index: {}]
  %s13 = inlined_call_operand.hbm [shape: bf16[128,128], index: 13, kind: input, shape index: {}]
  %s14 = inlined_call_operand.vmem [shape: f32[1,128], index: 14, kind: input, shape index: {}]
  %s15 = inlined_call_operand.hbm [shape: bf16[128,128], index: 15, kind: input, shape index: {}]
  %s16 = inlined_call_operand.vmem [shape: f32[1,128], index: 16, kind: input, shape index: {}]
  %s17 = inlined_call_operand.hbm [shape: bf16[128,128], index: 17, kind: input, shape index: {}]
  %s18 = inlined_call_operand.vmem [shape: f32[1,128], index: 18, kind: input, shape index: {}]
  %s19 = inlined_call_operand.vmem [shape: f32[8,3], index: 19, kind: output, shape index: {}]
  %s20 = sld [smem:[#allocation0]]
  $region122: #{tpu_custom_call.1} parent=0
    _
  %s22 = ssub.s32 1, %s20
  %s23 = scalar_select 0, %s22, %s20
  $region1: #{tpu_custom_call.1} parent=0
    #allocation2 [shape = 'u8[512]{0}', space=vmem, size = 0x400, scoped, tag = 'input window, operand 2, single buffered']
    #allocation3 [shape = 's32[1]{0}', space=sflag, size = 0x4, scoped, tag = 'scoped memory for tpu_custom_call.1']
    #allocation4 [shape = 'u8[65536]{0}', space=vmem, size = 0x10000, scoped, tag = 'input window, operand 3, single buffered']
    #allocation5 [shape = 's32[1]{0}', space=sflag, size = 0x4, scoped, tag = 'scoped memory for tpu_custom_call.1']
    #allocation6 [shape = 'u8[262144]{0}', space=vmem, size = 0x40000, scoped, tag = 'input window, operand 5, single buffered']
    #allocation7 [shape = 'u8[393216]{0}', space=vmem, size = 0x60000, scoped, tag = 'input window, operand 7, single buffered']
    #allocation8 [shape = 's32[1]{0}', space=sflag, size = 0x4, scoped, tag = 'scoped memory for tpu_custom_call.1']
    #allocation9 [shape = 'u8[196608]{0}', space=vmem, size = 0x30000, scoped, tag = 'input window, operand 9, single buffered']
    #allocation10 [shape = 'u8[65536]{0}', space=vmem, size = 0x10000, scoped, tag = 'input window, operand 11, single buffered']
    #allocation11 [shape = 's32[1]{0}', space=sflag, size = 0x4, scoped, tag = 'scoped memory for tpu_custom_call.1']
    #allocation12 [shape = 'u8[32768]{0}', space=vmem, size = 0x8000, scoped, tag = 'input window, operand 13, single buffered']
    #allocation13 [shape = 'u8[32768]{0}', space=vmem, size = 0x8000, scoped, tag = 'input window, operand 15, single buffered']
    #allocation14 [shape = 's32[1]{0}', space=sflag, size = 0x4, scoped, tag = 'scoped memory for tpu_custom_call.1']
    #allocation15 [shape = 'u8[32768]{0}', space=vmem, size = 0x8000, scoped, tag = 'input window, operand 17, single buffered']
    %24 = vsyncpa [#allocation3], 0
    %25 = vsyncpa [#allocation5], 0
    %26 = vsyncpa [#allocation8], 0
    %27 = vsyncpa [#allocation11], 0
    %28 = vsyncpa [#allocation14], 0
    // Predicated region
    $region2: #{tpu_custom_call.1} parent=1 // pred_check
      _
    $region3: #{tpu_custom_call.1} parent=1 // pred_check_branch
      %30 = sbr.rel (0) target = $region5
    $region4: #{tpu_custom_call.1} parent=1 // pred_region
      _
    $region5: #{tpu_custom_call.1} parent=1 // pred_fallthru
      _
    // Predicated region
    $region6: #{tpu_custom_call.1} parent=1 // pred_check
      _
    $region7: #{tpu_custom_call.1} parent=1 // pred_check_branch
      %32 = sbr.rel (0) target = $region9
    $region8: #{tpu_custom_call.1} parent=1 // pred_region
      _
    $region9: #{tpu_custom_call.1} parent=1 // pred_fallthru
      _
    // Predicated region
    $region10: #{tpu_custom_call.1} parent=1 // pred_check
      _
    $region11: #{tpu_custom_call.1} parent=1 // pred_check_branch
      %34 = sbr.rel (0) target = $region13
    $region12: #{tpu_custom_call.1} parent=1 // pred_region
      %36 = vsyncadd [#allocation3], 0
      %s38 = sshll.u32 %s2, 4
      %s39 = int_to_ptr.hbm [resolvable:$true] %s38
      %s40 = sshll.u32 [#allocation2], 4
      %s41 = int_to_ptr.vmem [resolvable:$true] %s40
      %43 = dma.hbm_to_vmem [thread:$0]  %s39, 16, %s41, [#allocation3]
    $region13: #{tpu_custom_call.1} parent=1 // pred_fallthru
      _
    // Predicated region
    $region14: #{tpu_custom_call.1} parent=1 // pred_check
      _
    $region15: #{tpu_custom_call.1} parent=1 // pred_check_branch
      %45 = sbr.rel (0) target = $region17
    $region16: #{tpu_custom_call.1} parent=1 // pred_region
      %47 = vsyncadd [#allocation5], 0
      %s48 = sshll.u32 %s3, 4
      %s49 = int_to_ptr.hbm [resolvable:$true] %s48
      %s50 = sshll.u32 [#allocation4], 4
      %s51 = int_to_ptr.vmem [resolvable:$true] %s50
      %56 = dma.hbm_to_vmem [thread:$0]  %s49, 2048, %s51, [#allocation5], 128, 128, 8
    $region17: #{tpu_custom_call.1} parent=1 // pred_fallthru
      _
    // Predicated region
    $region18: #{tpu_custom_call.1} parent=1 // pred_check
      _
    $region19: #{tpu_custom_call.1} parent=1 // pred_check_branch
      %58 = sbr.rel (0) target = $region21
    $region20: #{tpu_custom_call.1} parent=1 // pred_region
      _
    $region21: #{tpu_custom_call.1} parent=1 // pred_fallthru
      _
    // Predicated region
    $region22: #{tpu_custom_call.1} parent=1 // pred_check
      _
    $region23: #{tpu_custom_call.1} parent=1 // pred_check_branch
      %60 = sbr.rel (0) target = $region25
    $region24: #{tpu_custom_call.1} parent=1 // pred_region
      %62 = vsyncadd [#allocation5], 0
      %s63 = sshll.u32 %s5, 4
      %s64 = int_to_ptr.hbm [resolvable:$true] %s63
      %s65 = sshll.u32 [#allocation6], 4
      %s66 = int_to_ptr.vmem [resolvable:$true] %s65
      %71 = dma.hbm_to_vmem [thread:$0]  %s64, 8192, %s66, [#allocation5], 256, 256, 16
    $region25: #{tpu_custom_call.1} parent=1 // pred_fallthru
      _
    // Predicated region
    $region26: #{tpu_custom_call.1} parent=1 // pred_check
      _
    $region27: #{tpu_custom_call.1} parent=1 // pred_check_branch
      %73 = sbr.rel (0) target = $region29
    $region28: #{tpu_custom_call.1} parent=1 // pred_region
      _
    $region29: #{tpu_custom_call.1} parent=1 // pred_fallthru
      _
    // Predicated region
    $region30: #{tpu_custom_call.1} parent=1 // pred_check
      _
    $region31: #{tpu_custom_call.1} parent=1 // pred_check_branch
      %75 = sbr.rel (0) target = $region33
    $region32: #{tpu_custom_call.1} parent=1 // pred_region
      %77 = vsyncadd [#allocation8], 0
      %s78 = sshll.u32 %s7, 4
      %s79 = int_to_ptr.hbm [resolvable:$true] %s78
      %s80 = sshll.u32 [#allocation7], 4
      %s81 = int_to_ptr.vmem [resolvable:$true] %s80
      %86 = dma.hbm_to_vmem [thread:$0]  %s79, 12288, %s81, [#allocation8], 192, 192, 12
    $region33: #{tpu_custom_call.1} parent=1 // pred_fallthru
      _
    // Predicated region
    $region34: #{tpu_custom_call.1} parent=1 // pred_check
      _
    $region35: #{tpu_custom_call.1} parent=1 // pred_check_branch
      %88 = sbr.rel (0) target = $region37
    $region36: #{tpu_custom_call.1} parent=1 // pred_region
      _
    $region37: #{tpu_custom_call.1} parent=1 // pred_fallthru
      _
    // Predicated region
    $region38: #{tpu_custom_call.1} parent=1 // pred_check
      _
    $region39: #{tpu_custom_call.1} parent=1 // pred_check_branch
      %90 = sbr.rel (0) target = $region41
    $region40: #{tpu_custom_call.1} parent=1 // pred_region
      %92 = vsyncadd [#allocation8], 0
      %s93 = sshll.u32 %s9, 4
      %s94 = int_to_ptr.hbm [resolvable:$true] %s93
      %s95 = sshll.u32 [#allocation9], 4
      %s96 = int_to_ptr.vmem [resolvable:$true] %s95
      %101 = dma.hbm_to_vmem [thread:$0]  %s94, 6144, %s96, [#allocation8], 128, 128, 8
    $region41: #{tpu_custom_call.1} parent=1 // pred_fallthru
      _
    // Predicated region
    $region42: #{tpu_custom_call.1} parent=1 // pred_check
      _
    $region43: #{tpu_custom_call.1} parent=1 // pred_check_branch
      %103 = sbr.rel (0) target = $region45
    $region44: #{tpu_custom_call.1} parent=1 // pred_region
      _
    $region45: #{tpu_custom_call.1} parent=1 // pred_fallthru
      _
    // Predicated region
    $region46: #{tpu_custom_call.1} parent=1 // pred_check
      _
    $region47: #{tpu_custom_call.1} parent=1 // pred_check_branch
      %105 = sbr.rel (0) target = $region49
    $region48: #{tpu_custom_call.1} parent=1 // pred_region
      %107 = vsyncadd [#allocation11], 0
      %s108 = sshll.u32 %s11, 4
      %s109 = int_to_ptr.hbm [resolvable:$true] %s108
      %s110 = sshll.u32 [#allocation10], 4
      %s111 = int_to_ptr.vmem [resolvable:$true] %s110
      %116 = dma.hbm_to_vmem [thread:$0]  %s109, 2048, %s111, [#allocation11], 64, 64, 4
    $region49: #{tpu_custom_call.1} parent=1 // pred_fallthru
      _
    // Predicated region
    $region50: #{tpu_custom_call.1} parent=1 // pred_check
      _
    $region51: #{tpu_custom_call.1} parent=1 // pred_check_branch
      %118 = sbr.rel (0) target = $region53
    $region52: #{tpu_custom_call.1} parent=1 // pred_region
      _
    $region53: #{tpu_custom_call.1} parent=1 // pred_fallthru
      _
    // Predicated region
    $region54: #{tpu_custom_call.1} parent=1 // pred_check
      _
    $region55: #{tpu_custom_call.1} parent=1 // pred_check_branch
      %120 = sbr.rel (0) target = $region57
    $region56: #{tpu_custom_call.1} parent=1 // pred_region
      %122 = vsyncadd [#allocation11], 0
      %s123 = sshll.u32 %s13, 4
      %s124 = int_to_ptr.hbm [resolvable:$true] %s123
      %s125 = sshll.u32 [#allocation12], 4
      %s126 = int_to_ptr.vmem [resolvable:$true] %s125
      %131 = dma.hbm_to_vmem [thread:$0]  %s124, 1024, %s126, [#allocation11], 64, 64, 4
    $region57: #{tpu_custom_call.1} parent=1 // pred_fallthru
      _
    // Predicated region
    $region58: #{tpu_custom_call.1} parent=1 // pred_check
      _
    $region59: #{tpu_custom_call.1} parent=1 // pred_check_branch
      %133 = sbr.rel (0) target = $region61
    $region60: #{tpu_custom_call.1} parent=1 // pred_region
      _
    $region61: #{tpu_custom_call.1} parent=1 // pred_fallthru
      _
    // Predicated region
    $region62: #{tpu_custom_call.1} parent=1 // pred_check
      _
    $region63: #{tpu_custom_call.1} parent=1 // pred_check_branch
      %135 = sbr.rel (0) target = $region65
    $region64: #{tpu_custom_call.1} parent=1 // pred_region
      %137 = vsyncadd [#allocation14], 0
      %s138 = sshll.u32 %s15, 4
      %s139 = int_to_ptr.hbm [resolvable:$true] %s138
      %s140 = sshll.u32 [#allocation13], 4
      %s141 = int_to_ptr.vmem [resolvable:$true] %s140
      %146 = dma.hbm_to_vmem [thread:$0]  %s139, 1024, %s141, [#allocation14], 64, 64, 4
    $region65: #{tpu_custom_call.1} parent=1 // pred_fallthru
      _
    // Predicated region
    $region66: #{tpu_custom_call.1} parent=1 // pred_check
      _
    $region67: #{tpu_custom_call.1} parent=1 // pred_check_branch
      %148 = sbr.rel (0) target = $region69
    $region68: #{tpu_custom_call.1} parent=1 // pred_region
      _
    $region69: #{tpu_custom_call.1} parent=1 // pred_fallthru
      _
    // Predicated region
    $region70: #{tpu_custom_call.1} parent=1 // pred_check
      _
    $region71: #{tpu_custom_call.1} parent=1 // pred_check_branch
      %150 = sbr.rel (0) target = $region73
    $region72: #{tpu_custom_call.1} parent=1 // pred_region
      %152 = vsyncadd [#allocation14], 0
      %s153 = sshll.u32 %s17, 4
      %s154 = int_to_ptr.hbm [resolvable:$true] %s153
      %s155 = sshll.u32 [#allocation15], 4
      %s156 = int_to_ptr.vmem [resolvable:$true] %s155
      %161 = dma.hbm_to_vmem [thread:$0]  %s154, 1024, %s156, [#allocation14], 64, 64, 4
    $region73: #{tpu_custom_call.1} parent=1 // pred_fallthru
      _
    // Predicated region
    $region74: #{tpu_custom_call.1} parent=1 // pred_check
      _
    $region75: #{tpu_custom_call.1} parent=1 // pred_check_branch
      %163 = sbr.rel (0) target = $region77
    $region76: #{tpu_custom_call.1} parent=1 // pred_region
      _
    $region77: #{tpu_custom_call.1} parent=1 // pred_fallthru
      _
    // Predicated region
    $region78: #{tpu_custom_call.1} parent=1 // pred_check
      _
    $region79: #{tpu_custom_call.1} parent=1 // pred_check_branch
      %165 = sbr.rel (0) target = $region81
    $region80: #{tpu_custom_call.1} parent=1 // pred_region
      %167 = dma.done [#allocation3], 16
    $region81: #{tpu_custom_call.1} parent=1 // pred_fallthru
      _
    // Predicated region
    $region82: #{tpu_custom_call.1} parent=1 // pred_check
      _
    $region83: #{tpu_custom_call.1} parent=1 // pred_check_branch
      %169 = sbr.rel (0) target = $region85
    $region84: #{tpu_custom_call.1} parent=1 // pred_region
      %171 = dma.done [#allocation5], 2048
    $region85: #{tpu_custom_call.1} parent=1 // pred_fallthru
      _
    // Predicated region
    $region86: #{tpu_custom_call.1} parent=1 // pred_check
      _
    $region87: #{tpu_custom_call.1} parent=1 // pred_check_branch
      %173 = sbr.rel (0) target = $region89
    $region88: #{tpu_custom_call.1} parent=1 // pred_region
      %175 = dma.done [#allocation5], 8192
    $region89: #{tpu_custom_call.1} parent=1 // pred_fallthru
      _
    // Predicated region
    $region90: #{tpu_custom_call.1} parent=1 // pred_check
      _
    $region91: #{tpu_custom_call.1} parent=1 // pred_check_branch
      %177 = sbr.rel (0) target = $region93
    $region92: #{tpu_custom_call.1} parent=1 // pred_region
      %179 = dma.done [#allocation8], 12288
    $region93: #{tpu_custom_call.1} parent=1 // pred_fallthru
      _
    // Predicated region
    $region94: #{tpu_custom_call.1} parent=1 // pred_check
      _
    $region95: #{tpu_custom_call.1} parent=1 // pred_check_branch
      %181 = sbr.rel (0) target = $region97
    $region96: #{tpu_custom_call.1} parent=1 // pred_region
      %183 = dma.done [#allocation8], 6144
    $region97: #{tpu_custom_call.1} parent=1 // pred_fallthru
      _
    // Predicated region
    $region98: #{tpu_custom_call.1} parent=1 // pred_check
      _
    $region99: #{tpu_custom_call.1} parent=1 // pred_check_branch
      %185 = sbr.rel (0) target = $region101
    $region100: #{tpu_custom_call.1} parent=1 // pred_region
      %187 = dma.done [#allocation11], 2048
    $region101: #{tpu_custom_call.1} parent=1 // pred_fallthru
      _
    // Predicated region
    $region102: #{tpu_custom_call.1} parent=1 // pred_check
      _
    $region103: #{tpu_custom_call.1} parent=1 // pred_check_branch
      %189 = sbr.rel (0) target = $region105
    $region104: #{tpu_custom_call.1} parent=1 // pred_region
      %191 = dma.done [#allocation11], 1024
    $region105: #{tpu_custom_call.1} parent=1 // pred_fallthru
      _
    // Predicated region
    $region106: #{tpu_custom_call.1} parent=1 // pred_check
      _
    $region107: #{tpu_custom_call.1} parent=1 // pred_check_branch
      %193 = sbr.rel (0) target = $region109
    $region108: #{tpu_custom_call.1} parent=1 // pred_region
      %195 = dma.done [#allocation14], 1024
    $region109: #{tpu_custom_call.1} parent=1 // pred_fallthru
      _
    // Predicated region
    $region110: #{tpu_custom_call.1} parent=1 // pred_check
      _
    $region111: #{tpu_custom_call.1} parent=1 // pred_check_branch
      %197 = sbr.rel (0) target = $region113
    $region112: #{tpu_custom_call.1} parent=1 // pred_region
      %199 = dma.done [#allocation14], 1024
    $region113: #{tpu_custom_call.1} parent=1 // pred_fallthru
      _
    %v200 = vld [vmem:[%s0] sm:$0xff]
    %v201 = vld [vmem:[%s1] sm:$0x1]
    %203 = vset.pattern.permute.xlu0 0
    %204 = vperm.xlu0 %203, %v200
    %v205 = vpop.permute.xlu0 %204
    %v207 = vperm.slane %v201, 0
    %v208 = vmul.f32 %v205, %v207
    %v209 = vld [vmem:[%s1 + $0x1] sm:$0x1]
    %210 = vset.pattern.permute.xlu0 1
    %211 = vperm.xlu0 %210, %v200
    %v212 = vpop.permute.xlu0 %211
    %v214 = vperm.slane %v209, 0
    %v215 = vmul.f32 %v212, %v214
    %v216 = vadd.f32 %v208, %v215
    %v217 = vld [vmem:[%s1 + $0x2] sm:$0x1]
    %218 = vset.pattern.permute.xlu0 2
    %219 = vperm.xlu0 %218, %v200
    %v220 = vpop.permute.xlu0 %219
    %v222 = vperm.slane %v217, 0
    %v223 = vmul.f32 %v220, %v222
    %v224 = vadd.f32 %v216, %v223
    %v225 = vld [vmem:[#allocation2] sm:$0x1]
    %v227 = vperm.slane %v225, 0
    %v229 = vadd.f32 %v224, %v227
    %v230 = vmul.f32 %v229, 0.01
    %v231 = vmax.f32 %v229, %v230
    %v232 = vld [vmem:[#allocation4] sm:$0xff]
    %v233 = vld [vmem:[#allocation4 + $0x8] sm:$0xff]
    %v234 = vld [vmem:[#allocation4 + $0x10] sm:$0xff]
    %v235 = vld [vmem:[#allocation4 + $0x18] sm:$0xff]
    %v236 = vld [vmem:[#allocation4 + $0x20] sm:$0xff]
    %v237 = vld [vmem:[#allocation4 + $0x28] sm:$0xff]
    %v238 = vld [vmem:[#allocation4 + $0x30] sm:$0xff]
    %v239 = vld [vmem:[#allocation4 + $0x38] sm:$0xff]
    %v240 = vld [vmem:[#allocation4 + $0x40] sm:$0xff]
    %v241 = vld [vmem:[#allocation4 + $0x48] sm:$0xff]
    %v242 = vld [vmem:[#allocation4 + $0x50] sm:$0xff]
    %v243 = vld [vmem:[#allocation4 + $0x58] sm:$0xff]
    %v244 = vld [vmem:[#allocation4 + $0x60] sm:$0xff]
    %v245 = vld [vmem:[#allocation4 + $0x68] sm:$0xff]
    %v246 = vld [vmem:[#allocation4 + $0x70] sm:$0xff]
    %v247 = vld [vmem:[#allocation4 + $0x78] sm:$0xff]
    %v248 = vld [vmem:[%s4] sm:$0x3]
    %v249 = vpack.c.bf16 %v231, %v231
    %v251 = vperm.slane %v248, 0
    %v252 = vperm.slane %v248, 1
    %v271 = vunpack.c.l.b16 %v232
    %v272 = vunpack.c.h.b16 %v232
    %v273 = vunpack.c.l.b16 %v233
    %v274 = vunpack.c.h.b16 %v233
    %v275 = vunpack.c.l.b16 %v234
    %v276 = vunpack.c.h.b16 %v234
    %v277 = vunpack.c.l.b16 %v235
    %v278 = vunpack.c.h.b16 %v235
    %v279 = vunpack.c.l.b16 %v236
    %v280 = vunpack.c.h.b16 %v236
    %v281 = vunpack.c.l.b16 %v237
    %v282 = vunpack.c.h.b16 %v237
    %v283 = vunpack.c.l.b16 %v238
    %v284 = vunpack.c.h.b16 %v238
    %v285 = vunpack.c.l.b16 %v239
    %v286 = vunpack.c.h.b16 %v239
    %v287 = vunpack.c.l.b16 %v240
    %v288 = vunpack.c.h.b16 %v240
    %v289 = vunpack.c.l.b16 %v241
    %v290 = vunpack.c.h.b16 %v241
    %v291 = vunpack.c.l.b16 %v242
    %v292 = vunpack.c.h.b16 %v242
    %v293 = vunpack.c.l.b16 %v243
    %v294 = vunpack.c.h.b16 %v243
    %v295 = vunpack.c.l.b16 %v244
    %v296 = vunpack.c.h.b16 %v244
    %v297 = vunpack.c.l.b16 %v245
    %v298 = vunpack.c.h.b16 %v245
    %v299 = vunpack.c.l.b16 %v246
    %v300 = vunpack.c.h.b16 %v246
    %v301 = vunpack.c.l.b16 %v247
    %v302 = vunpack.c.h.b16 %v247
    %v303 = vpack.c.b16 %v273, %v271
    %v304 = vpack.c.b16 %v274, %v272
    %v305 = vpack.c.b16 %v277, %v275
    %v306 = vpack.c.b16 %v278, %v276
    %v307 = vpack.c.b16 %v281, %v279
    %v308 = vpack.c.b16 %v282, %v280
    %v309 = vpack.c.b16 %v285, %v283
    %v310 = vpack.c.b16 %v286, %v284
    %v311 = vpack.c.b16 %v289, %v287
    %v312 = vpack.c.b16 %v290, %v288
    %v313 = vpack.c.b16 %v293, %v291
    %v314 = vpack.c.b16 %v294, %v292
    %v315 = vpack.c.b16 %v297, %v295
    %v316 = vpack.c.b16 %v298, %v296
    %v317 = vpack.c.b16 %v301, %v299
    %v318 = vpack.c.b16 %v302, %v300
    %335 = vmatpush.bf16.msra.mxu0 %v317
    %336 = vmatpush.bf16.msra.mxu0 %v315
    %337 = vmatpush.bf16.msra.mxu0 %v313
    %338 = vmatpush.bf16.msra.mxu0 %v311
    %339 = vmatpush.bf16.msra.mxu0 %v309
    %340 = vmatpush.bf16.msra.mxu0 %v307
    %341 = vmatpush.bf16.msra.mxu0 %v305
    %342 = vmatpush.bf16.msra.mxu0 %v303
    %343 = vmatmul.bf16.gmra.mxu0 %v249
    %v344 = vpop.f32.mrf.mxu0
    %v345 = vadd.f32 %v251, %v344
    %v346 = vpop.f32.mrf.mxu0
    %347 = vdwg.mxu0
    %348 = vmatpush.bf16.msra.mxu0 %v318
    %349 = vmatpush.bf16.msra.mxu0 %v316
    %350 = vmatpush.bf16.msra.mxu0 %v314
    %351 = vmatpush.bf16.msra.mxu0 %v312
    %352 = vmatpush.bf16.msra.mxu0 %v310
    %353 = vmatpush.bf16.msra.mxu0 %v308
    %354 = vmatpush.bf16.msra.mxu0 %v306
    %355 = vmatpush.bf16.msra.mxu0 %v304
    %356 = vmatmul.bf16.gmra.mxu0 %v249
    %v357 = vpop.f32.mrf.mxu0
    %v358 = vadd.f32 %v252, %v357
    %v359 = vpop.f32.mrf.mxu0
    %360 = vdwg.mxu0
    %v361 = vmul.f32 %v345, 0.01
    %v362 = vmul.f32 %v358, 0.01
    %v363 = vmax.f32 %v345, %v361
    %v364 = vmax.f32 %v358, %v362
    %v365 = vld [vmem:[#allocation6] sm:$0xff]
    %v366 = vld [vmem:[#allocation6 + $0x8] sm:$0xff]
    %v367 = vld [vmem:[#allocation6 + $0x10] sm:$0xff]
    %v368 = vld [vmem:[#allocation6 + $0x18] sm:$0xff]
    %v369 = vld [vmem:[#allocation6 + $0x20] sm:$0xff]
    %v370 = vld [vmem:[#allocation6 + $0x28] sm:$0xff]
    %v371 = vld [vmem:[#allocation6 + $0x30] sm:$0xff]
    %v372 = vld [vmem:[#allocation6 + $0x38] sm:$0xff]
    %v373 = vld [vmem:[#allocation6 + $0x40] sm:$0xff]
    %v374 = vld [vmem:[#allocation6 + $0x48] sm:$0xff]
    %v375 = vld [vmem:[#allocation6 + $0x50] sm:$0xff]
    %v376 = vld [vmem:[#allocation6 + $0x58] sm:$0xff]
    %v377 = vld [vmem:[#allocation6 + $0x60] sm:$0xff]
    %v378 = vld [vmem:[#allocation6 + $0x68] sm:$0xff]
    %v379 = vld [vmem:[#allocation6 + $0x70] sm:$0xff]
    %v380 = vld [vmem:[#allocation6 + $0x78] sm:$0xff]
    %v381 = vld [vmem:[#allocation6 + $0x80] sm:$0xff]
    %v382 = vld [vmem:[#allocation6 + $0x88] sm:$0xff]
    %v383 = vld [vmem:[#allocation6 + $0x90] sm:$0xff]
    %v384 = vld [vmem:[#allocation6 + $0x98] sm:$0xff]
    %v385 = vld [vmem:[#allocation6 + $0xa0] sm:$0xff]
    %v386 = vld [vmem:[#allocation6 + $0xa8] sm:$0xff]
    %v387 = vld [vmem:[#allocation6 + $0xb0] sm:$0xff]
    %v388 = vld [vmem:[#allocation6 + $0xb8] sm:$0xff]
    %v389 = vld [vmem:[#allocation6 + $0xc0] sm:$0xff]
    %v390 = vld [vmem:[#allocation6 + $0xc8] sm:$0xff]
    %v391 = vld [vmem:[#allocation6 + $0xd0] sm:$0xff]
    %v392 = vld [vmem:[#allocation6 + $0xd8] sm:$0xff]
    %v393 = vld [vmem:[#allocation6 + $0xe0] sm:$0xff]
    %v394 = vld [vmem:[#allocation6 + $0xe8] sm:$0xff]
    %v395 = vld [vmem:[#allocation6 + $0xf0] sm:$0xff]
    %v396 = vld [vmem:[#allocation6 + $0xf8] sm:$0xff]
    %v397 = vld [vmem:[#allocation6 + $0x100] sm:$0xff]
    %v398 = vld [vmem:[#allocation6 + $0x108] sm:$0xff]
    %v399 = vld [vmem:[#allocation6 + $0x110] sm:$0xff]
    %v400 = vld [vmem:[#allocation6 + $0x118] sm:$0xff]
    %v401 = vld [vmem:[#allocation6 + $0x120] sm:$0xff]
    %v402 = vld [vmem:[#allocation6 + $0x128] sm:$0xff]
    %v403 = vld [vmem:[#allocation6 + $0x130] sm:$0xff]
    %v404 = vld [vmem:[#allocation6 + $0x138] sm:$0xff]
    %v405 = vld [vmem:[#allocation6 + $0x140] sm:$0xff]
    %v406 = vld [vmem:[#allocation6 + $0x148] sm:$0xff]
    %v407 = vld [vmem:[#allocation6 + $0x150] sm:$0xff]
    %v408 = vld [vmem:[#allocation6 + $0x158] sm:$0xff]
    %v409 = vld [vmem:[#allocation6 + $0x160] sm:$0xff]
    %v410 = vld [vmem:[#allocation6 + $0x168] sm:$0xff]
    %v411 = vld [vmem:[#allocation6 + $0x170] sm:$0xff]
    %v412 = vld [vmem:[#allocation6 + $0x178] sm:$0xff]
    %v413 = vld [vmem:[#allocation6 + $0x180] sm:$0xff]
    %v414 = vld [vmem:[#allocation6 + $0x188] sm:$0xff]
    %v415 = vld [vmem:[#allocation6 + $0x190] sm:$0xff]
    %v416 = vld [vmem:[#allocation6 + $0x198] sm:$0xff]
    %v417 = vld [vmem:[#allocation6 + $0x1a0] sm:$0xff]
    %v418 = vld [vmem:[#allocation6 + $0x1a8] sm:$0xff]
    %v419 = vld [vmem:[#allocation6 + $0x1b0] sm:$0xff]
    %v420 = vld [vmem:[#allocation6 + $0x1b8] sm:$0xff]
    %v421 = vld [vmem:[#allocation6 + $0x1c0] sm:$0xff]
    %v422 = vld [vmem:[#allocation6 + $0x1c8] sm:$0xff]
    %v423 = vld [vmem:[#allocation6 + $0x1d0] sm:$0xff]
    %v424 = vld [vmem:[#allocation6 + $0x1d8] sm:$0xff]
    %v425 = vld [vmem:[#allocation6 + $0x1e0] sm:$0xff]
    %v426 = vld [vmem:[#allocation6 + $0x1e8] sm:$0xff]
    %v427 = vld [vmem:[#allocation6 + $0x1f0] sm:$0xff]
    %v428 = vld [vmem:[#allocation6 + $0x1f8] sm:$0xff]
    %v429 = vld [vmem:[%s6] sm:$0xf]
    %v430 = vpack.c.bf16 %v363, %v363
    %v431 = vpack.c.bf16 %v364, %v364
    %v433 = vperm.slane %v429, 0
    %v434 = vperm.slane %v429, 1
    %v435 = vperm.slane %v429, 2
    %v436 = vperm.slane %v429, 3
    %v505 = vunpack.c.l.b16 %v365
    %v506 = vunpack.c.h.b16 %v365
    %v507 = vunpack.c.l.b16 %v366
    %v508 = vunpack.c.h.b16 %v366
    %v509 = vunpack.c.l.b16 %v367
    %v510 = vunpack.c.h.b16 %v367
    %v511 = vunpack.c.l.b16 %v368
    %v512 = vunpack.c.h.b16 %v368
    %v513 = vunpack.c.l.b16 %v369
    %v514 = vunpack.c.h.b16 %v369
    %v515 = vunpack.c.l.b16 %v370
    %v516 = vunpack.c.h.b16 %v370
    %v517 = vunpack.c.l.b16 %v371
    %v518 = vunpack.c.h.b16 %v371
    %v519 = vunpack.c.l.b16 %v372
    %v520 = vunpack.c.h.b16 %v372
    %v521 = vunpack.c.l.b16 %v373
    %v522 = vunpack.c.h.b16 %v373
    %v523 = vunpack.c.l.b16 %v374
    %v524 = vunpack.c.h.b16 %v374
    %v525 = vunpack.c.l.b16 %v375
    %v526 = vunpack.c.h.b16 %v375
    %v527 = vunpack.c.l.b16 %v376
    %v528 = vunpack.c.h.b16 %v376
    %v529 = vunpack.c.l.b16 %v377
    %v530 = vunpack.c.h.b16 %v377
    %v531 = vunpack.c.l.b16 %v378
    %v532 = vunpack.c.h.b16 %v378
    %v533 = vunpack.c.l.b16 %v379
    %v534 = vunpack.c.h.b16 %v379
    %v535 = vunpack.c.l.b16 %v380
    %v536 = vunpack.c.h.b16 %v380
    %v537 = vunpack.c.l.b16 %v381
    %v538 = vunpack.c.h.b16 %v381
    %v539 = vunpack.c.l.b16 %v382
    %v540 = vunpack.c.h.b16 %v382
    %v541 = vunpack.c.l.b16 %v383
    %v542 = vunpack.c.h.b16 %v383
    %v543 = vunpack.c.l.b16 %v384
    %v544 = vunpack.c.h.b16 %v384
    %v545 = vunpack.c.l.b16 %v385
    %v546 = vunpack.c.h.b16 %v385
    %v547 = vunpack.c.l.b16 %v386
    %v548 = vunpack.c.h.b16 %v386
    %v549 = vunpack.c.l.b16 %v387
    %v550 = vunpack.c.h.b16 %v387
    %v551 = vunpack.c.l.b16 %v388
    %v552 = vunpack.c.h.b16 %v388
    %v553 = vunpack.c.l.b16 %v389
    %v554 = vunpack.c.h.b16 %v389
    %v555 = vunpack.c.l.b16 %v390
    %v556 = vunpack.c.h.b16 %v390
    %v557 = vunpack.c.l.b16 %v391
    %v558 = vunpack.c.h.b16 %v391
    %v559 = vunpack.c.l.b16 %v392
    %v560 = vunpack.c.h.b16 %v392
    %v561 = vunpack.c.l.b16 %v393
    %v562 = vunpack.c.h.b16 %v393
    %v563 = vunpack.c.l.b16 %v394
    %v564 = vunpack.c.h.b16 %v394
    %v565 = vunpack.c.l.b16 %v395
    %v566 = vunpack.c.h.b16 %v395
    %v567 = vunpack.c.l.b16 %v396
    %v568 = vunpack.c.h.b16 %v396
    %v569 = vunpack.c.l.b16 %v397
    %v570 = vunpack.c.h.b16 %v397
    %v571 = vunpack.c.l.b16 %v398
    %v572 = vunpack.c.h.b16 %v398
    %v573 = vunpack.c.l.b16 %v399
    %v574 = vunpack.c.h.b16 %v399
    %v575 = vunpack.c.l.b16 %v400
    %v576 = vunpack.c.h.b16 %v400
    %v577 = vunpack.c.l.b16 %v401
    %v578 = vunpack.c.h.b16 %v401
    %v579 = vunpack.c.l.b16 %v402
    %v580 = vunpack.c.h.b16 %v402
    %v581 = vunpack.c.l.b16 %v403
    %v582 = vunpack.c.h.b16 %v403
    %v583 = vunpack.c.l.b16 %v404
    %v584 = vunpack.c.h.b16 %v404
    %v585 = vunpack.c.l.b16 %v405
    %v586 = vunpack.c.h.b16 %v405
    %v587 = vunpack.c.l.b16 %v406
    %v588 = vunpack.c.h.b16 %v406
    %v589 = vunpack.c.l.b16 %v407
    %v590 = vunpack.c.h.b16 %v407
    %v591 = vunpack.c.l.b16 %v408
    %v592 = vunpack.c.h.b16 %v408
    %v593 = vunpack.c.l.b16 %v409
    %v594 = vunpack.c.h.b16 %v409
    %v595 = vunpack.c.l.b16 %v410
    %v596 = vunpack.c.h.b16 %v410
    %v597 = vunpack.c.l.b16 %v411
    %v598 = vunpack.c.h.b16 %v411
    %v599 = vunpack.c.l.b16 %v412
    %v600 = vunpack.c.h.b16 %v412
    %v601 = vunpack.c.l.b16 %v413
    %v602 = vunpack.c.h.b16 %v413
    %v603 = vunpack.c.l.b16 %v414
    %v604 = vunpack.c.h.b16 %v414
    %v605 = vunpack.c.l.b16 %v415
    %v606 = vunpack.c.h.b16 %v415
    %v607 = vunpack.c.l.b16 %v416
    %v608 = vunpack.c.h.b16 %v416
    %v609 = vunpack.c.l.b16 %v417
    %v610 = vunpack.c.h.b16 %v417
    %v611 = vunpack.c.l.b16 %v418
    %v612 = vunpack.c.h.b16 %v418
    %v613 = vunpack.c.l.b16 %v419
    %v614 = vunpack.c.h.b16 %v419
    %v615 = vunpack.c.l.b16 %v420
    %v616 = vunpack.c.h.b16 %v420
    %v617 = vunpack.c.l.b16 %v421
    %v618 = vunpack.c.h.b16 %v421
    %v619 = vunpack.c.l.b16 %v422
    %v620 = vunpack.c.h.b16 %v422
    %v621 = vunpack.c.l.b16 %v423
    %v622 = vunpack.c.h.b16 %v423
    %v623 = vunpack.c.l.b16 %v424
    %v624 = vunpack.c.h.b16 %v424
    %v625 = vunpack.c.l.b16 %v425
    %v626 = vunpack.c.h.b16 %v425
    %v627 = vunpack.c.l.b16 %v426
    %v628 = vunpack.c.h.b16 %v426
    %v629 = vunpack.c.l.b16 %v427
    %v630 = vunpack.c.h.b16 %v427
    %v631 = vunpack.c.l.b16 %v428
    %v632 = vunpack.c.h.b16 %v428
    %v633 = vpack.c.b16 %v509, %v505
    %v634 = vpack.c.b16 %v510, %v506
    %v635 = vpack.c.b16 %v511, %v507
    %v636 = vpack.c.b16 %v512, %v508
    %v637 = vpack.c.b16 %v517, %v513
    %v638 = vpack.c.b16 %v518, %v514
    %v639 = vpack.c.b16 %v519, %v515
    %v640 = vpack.c.b16 %v520, %v516
    %v641 = vpack.c.b16 %v525, %v521
    %v642 = vpack.c.b16 %v526, %v522
    %v643 = vpack.c.b16 %v527, %v523
    %v644 = vpack.c.b16 %v528, %v524
    %v645 = vpack.c.b16 %v533, %v529
    %v646 = vpack.c.b16 %v534, %v530
    %v647 = vpack.c.b16 %v535, %v531
    %v648 = vpack.c.b16 %v536, %v532
    %v649 = vpack.c.b16 %v541, %v537
    %v650 = vpack.c.b16 %v542, %v538
    %v651 = vpack.c.b16 %v543, %v539
    %v652 = vpack.c.b16 %v544, %v540
    %v653 = vpack.c.b16 %v549, %v545
    %v654 = vpack.c.b16 %v550, %v546
    %v655 = vpack.c.b16 %v551, %v547
    %v656 = vpack.c.b16 %v552, %v548
    %v657 = vpack.c.b16 %v557, %v553
    %v658 = vpack.c.b16 %v558, %v554
    %v659 = vpack.c.b16 %v559, %v555
    %v660 = vpack.c.b16 %v560, %v556
    %v661 = vpack.c.b16 %v565, %v561
    %v662 = vpack.c.b16 %v566, %v562
    %v663 = vpack.c.b16 %v567, %v563
    %v664 = vpack.c.b16 %v568, %v564
    %v665 = vpack.c.b16 %v573, %v569
    %v666 = vpack.c.b16 %v574, %v570
    %v667 = vpack.c.b16 %v575, %v571
    %v668 = vpack.c.b16 %v576, %v572
    %v669 = vpack.c.b16 %v581, %v577
    %v670 = vpack.c.b16 %v582, %v578
    %v671 = vpack.c.b16 %v583, %v579
    %v672 = vpack.c.b16 %v584, %v580
    %v673 = vpack.c.b16 %v589, %v585
    %v674 = vpack.c.b16 %v590, %v586
    %v675 = vpack.c.b16 %v591, %v587
    %v676 = vpack.c.b16 %v592, %v588
    %v677 = vpack.c.b16 %v597, %v593
    %v678 = vpack.c.b16 %v598, %v594
    %v679 = vpack.c.b16 %v599, %v595
    %v680 = vpack.c.b16 %v600, %v596
    %v681 = vpack.c.b16 %v605, %v601
    %v682 = vpack.c.b16 %v606, %v602
    %v683 = vpack.c.b16 %v607, %v603
    %v684 = vpack.c.b16 %v608, %v604
    %v685 = vpack.c.b16 %v613, %v609
    %v686 = vpack.c.b16 %v614, %v610
    %v687 = vpack.c.b16 %v615, %v611
    %v688 = vpack.c.b16 %v616, %v612
    %v689 = vpack.c.b16 %v621, %v617
    %v690 = vpack.c.b16 %v622, %v618
    %v691 = vpack.c.b16 %v623, %v619
    %v692 = vpack.c.b16 %v624, %v620
    %v693 = vpack.c.b16 %v629, %v625
    %v694 = vpack.c.b16 %v630, %v626
    %v695 = vpack.c.b16 %v631, %v627
    %v696 = vpack.c.b16 %v632, %v628
    %761 = vmatpush.bf16.msra.mxu0 %v661
    %762 = vmatpush.bf16.msra.mxu0 %v657
    %763 = vmatpush.bf16.msra.mxu0 %v653
    %764 = vmatpush.bf16.msra.mxu0 %v649
    %765 = vmatpush.bf16.msra.mxu0 %v645
    %766 = vmatpush.bf16.msra.mxu0 %v641
    %767 = vmatpush.bf16.msra.mxu0 %v637
    %768 = vmatpush.bf16.msra.mxu0 %v633
    %769 = vmatmul.bf16.gmra.mxu0 %v430
    %v770 = vpop.f32.mrf.mxu0
    %v771 = vadd.f32 %v433, %v770
    %v772 = vpop.f32.mrf.mxu0
    %773 = vdwg.mxu0
    %774 = vmatpush.bf16.msra.mxu0 %v693
    %775 = vmatpush.bf16.msra.mxu0 %v689
    %776 = vmatpush.bf16.msra.mxu0 %v685
    %777 = vmatpush.bf16.msra.mxu0 %v681
    %778 = vmatpush.bf16.msra.mxu0 %v677
    %779 = vmatpush.bf16.msra.mxu0 %v673
    %780 = vmatpush.bf16.msra.mxu0 %v669
    %781 = vmatpush.bf16.msra.mxu0 %v665
    %782 = vmatmul.bf16.gmra.mxu0 %v431
    %v783 = vpop.f32.mrf.mxu0
    %v784 = vadd.f32 %v771, %v783
    %v785 = vpop.f32.mrf.mxu0
    %786 = vdwg.mxu0
    %787 = vmatpush.bf16.msra.mxu0 %v662
    %788 = vmatpush.bf16.msra.mxu0 %v658
    %789 = vmatpush.bf16.msra.mxu0 %v654
    %790 = vmatpush.bf16.msra.mxu0 %v650
    %791 = vmatpush.bf16.msra.mxu0 %v646
    %792 = vmatpush.bf16.msra.mxu0 %v642
    %793 = vmatpush.bf16.msra.mxu0 %v638
    %794 = vmatpush.bf16.msra.mxu0 %v634
    %795 = vmatmul.bf16.gmra.mxu0 %v430
    %v796 = vpop.f32.mrf.mxu0
    %v797 = vadd.f32 %v434, %v796
    %v798 = vpop.f32.mrf.mxu0
    %799 = vdwg.mxu0
    %800 = vmatpush.bf16.msra.mxu0 %v694
    %801 = vmatpush.bf16.msra.mxu0 %v690
    %802 = vmatpush.bf16.msra.mxu0 %v686
    %803 = vmatpush.bf16.msra.mxu0 %v682
    %804 = vmatpush.bf16.msra.mxu0 %v678
    %805 = vmatpush.bf16.msra.mxu0 %v674
    %806 = vmatpush.bf16.msra.mxu0 %v670
    %807 = vmatpush.bf16.msra.mxu0 %v666
    %808 = vmatmul.bf16.gmra.mxu0 %v431
    %v809 = vpop.f32.mrf.mxu0
    %v810 = vadd.f32 %v797, %v809
    %v811 = vpop.f32.mrf.mxu0
    %812 = vdwg.mxu0
    %813 = vmatpush.bf16.msra.mxu0 %v663
    %814 = vmatpush.bf16.msra.mxu0 %v659
    %815 = vmatpush.bf16.msra.mxu0 %v655
    %816 = vmatpush.bf16.msra.mxu0 %v651
    %817 = vmatpush.bf16.msra.mxu0 %v647
    %818 = vmatpush.bf16.msra.mxu0 %v643
    %819 = vmatpush.bf16.msra.mxu0 %v639
    %820 = vmatpush.bf16.msra.mxu0 %v635
    %821 = vmatmul.bf16.gmra.mxu0 %v430
    %v822 = vpop.f32.mrf.mxu0
    %v823 = vadd.f32 %v435, %v822
    %v824 = vpop.f32.mrf.mxu0
    %825 = vdwg.mxu0
    %826 = vmatpush.bf16.msra.mxu0 %v695
    %827 = vmatpush.bf16.msra.mxu0 %v691
    %828 = vmatpush.bf16.msra.mxu0 %v687
    %829 = vmatpush.bf16.msra.mxu0 %v683
    %830 = vmatpush.bf16.msra.mxu0 %v679
    %831 = vmatpush.bf16.msra.mxu0 %v675
    %832 = vmatpush.bf16.msra.mxu0 %v671
    %833 = vmatpush.bf16.msra.mxu0 %v667
    %834 = vmatmul.bf16.gmra.mxu0 %v431
    %v835 = vpop.f32.mrf.mxu0
    %v836 = vadd.f32 %v823, %v835
    %v837 = vpop.f32.mrf.mxu0
    %838 = vdwg.mxu0
    %839 = vmatpush.bf16.msra.mxu0 %v664
    %840 = vmatpush.bf16.msra.mxu0 %v660
    %841 = vmatpush.bf16.msra.mxu0 %v656
    %842 = vmatpush.bf16.msra.mxu0 %v652
    %843 = vmatpush.bf16.msra.mxu0 %v648
    %844 = vmatpush.bf16.msra.mxu0 %v644
    %845 = vmatpush.bf16.msra.mxu0 %v640
    %846 = vmatpush.bf16.msra.mxu0 %v636
    %847 = vmatmul.bf16.gmra.mxu0 %v430
    %v848 = vpop.f32.mrf.mxu0
    %v849 = vadd.f32 %v436, %v848
    %v850 = vpop.f32.mrf.mxu0
    %851 = vdwg.mxu0
    %852 = vmatpush.bf16.msra.mxu0 %v696
    %853 = vmatpush.bf16.msra.mxu0 %v692
    %854 = vmatpush.bf16.msra.mxu0 %v688
    %855 = vmatpush.bf16.msra.mxu0 %v684
    %856 = vmatpush.bf16.msra.mxu0 %v680
    %857 = vmatpush.bf16.msra.mxu0 %v676
    %858 = vmatpush.bf16.msra.mxu0 %v672
    %859 = vmatpush.bf16.msra.mxu0 %v668
    %860 = vmatmul.bf16.gmra.mxu0 %v431
    %v861 = vpop.f32.mrf.mxu0
    %v862 = vadd.f32 %v849, %v861
    %v863 = vpop.f32.mrf.mxu0
    %864 = vdwg.mxu0
    %v865 = vmul.f32 %v784, 0.01
    %v866 = vmul.f32 %v810, 0.01
    %v867 = vmul.f32 %v836, 0.01
    %v868 = vmul.f32 %v862, 0.01
    %v869 = vmax.f32 %v784, %v865
    %v870 = vmax.f32 %v810, %v866
    %v871 = vmax.f32 %v836, %v867
    %v872 = vmax.f32 %v862, %v868
    %v873 = vld [vmem:[#allocation7] sm:$0xff]
    %v874 = vld [vmem:[#allocation7 + $0x8] sm:$0xf]
    %v875 = vld [vmem:[#allocation7 + $0xc] sm:$0xff]
    %v876 = vld [vmem:[#allocation7 + $0x14] sm:$0xf]
    %v877 = vld [vmem:[#allocation7 + $0x18] sm:$0xff]
    %v878 = vld [vmem:[#allocation7 + $0x20] sm:$0xf]
    %v879 = vld [vmem:[#allocation7 + $0x24] sm:$0xff]
    %v880 = vld [vmem:[#allocation7 + $0x2c] sm:$0xf]
    %v881 = vld [vmem:[#allocation7 + $0x30] sm:$0xff]
    %v882 = vld [vmem:[#allocation7 + $0x38] sm:$0xf]
    %v883 = vld [vmem:[#allocation7 + $0x3c] sm:$0xff]
    %v884 = vld [vmem:[#allocation7 + $0x44] sm:$0xf]
    %v885 = vld [vmem:[#allocation7 + $0x48] sm:$0xff]
    %v886 = vld [vmem:[#allocation7 + $0x50] sm:$0xf]
    %v887 = vld [vmem:[#allocation7 + $0x54] sm:$0xff]
    %v888 = vld [vmem:[#allocation7 + $0x5c] sm:$0xf]
    %v889 = vld [vmem:[#allocation7 + $0x60] sm:$0xff]
    %v890 = vld [vmem:[#allocation7 + $0x68] sm:$0xf]
    %v891 = vld [vmem:[#allocation7 + $0x6c] sm:$0xff]
    %v892 = vld [vmem:[#allocation7 + $0x74] sm:$0xf]
    %v893 = vld [vmem:[#allocation7 + $0x78] sm:$0xff]
    %v894 = vld [vmem:[#allocation7 + $0x80] sm:$0xf]
    %v895 = vld [vmem:[#allocation7 + $0x84] sm:$0xff]
    %v896 = vld [vmem:[#allocation7 + $0x8c] sm:$0xf]
    %v897 = vld [vmem:[#allocation7 + $0x90] sm:$0xff]
    %v898 = vld [vmem:[#allocation7 + $0x98] sm:$0xf]
    %v899 = vld [vmem:[#allocation7 + $0x9c] sm:$0xff]
    %v900 = vld [vmem:[#allocation7 + $0xa4] sm:$0xf]
    %v901 = vld [vmem:[#allocation7 + $0xa8] sm:$0xff]
    %v902 = vld [vmem:[#allocation7 + $0xb0] sm:$0xf]
    %v903 = vld [vmem:[#allocation7 + $0xb4] sm:$0xff]
    %v904 = vld [vmem:[#allocation7 + $0xbc] sm:$0xf]
    %v905 = vld [vmem:[#allocation7 + $0xc0] sm:$0xff]
    %v906 = vld [vmem:[#allocation7 + $0xc8] sm:$0xf]
    %v907 = vld [vmem:[#allocation7 + $0xcc] sm:$0xff]
    %v908 = vld [vmem:[#allocation7 + $0xd4] sm:$0xf]
    %v909 = vld [vmem:[#allocation7 + $0xd8] sm:$0xff]
    %v910 = vld [vmem:[#allocation7 + $0xe0] sm:$0xf]
    %v911 = vld [vmem:[#allocation7 + $0xe4] sm:$0xff]
    %v912 = vld [vmem:[#allocation7 + $0xec] sm:$0xf]
    %v913 = vld [vmem:[#allocation7 + $0xf0] sm:$0xff]
    %v914 = vld [vmem:[#allocation7 + $0xf8] sm:$0xf]
    %v915 = vld [vmem:[#allocation7 + $0xfc] sm:$0xff]
    %v916 = vld [vmem:[#allocation7 + $0x104] sm:$0xf]
    %v917 = vld [vmem:[#allocation7 + $0x108] sm:$0xff]
    %v918 = vld [vmem:[#allocation7 + $0x110] sm:$0xf]
    %v919 = vld [vmem:[#allocation7 + $0x114] sm:$0xff]
    %v920 = vld [vmem:[#allocation7 + $0x11c] sm:$0xf]
    %v921 = vld [vmem:[#allocation7 + $0x120] sm:$0xff]
    %v922 = vld [vmem:[#allocation7 + $0x128] sm:$0xf]
    %v923 = vld [vmem:[#allocation7 + $0x12c] sm:$0xff]
    %v924 = vld [vmem:[#allocation7 + $0x134] sm:$0xf]
    %v925 = vld [vmem:[#allocation7 + $0x138] sm:$0xff]
    %v926 = vld [vmem:[#allocation7 + $0x140] sm:$0xf]
    %v927 = vld [vmem:[#allocation7 + $0x144] sm:$0xff]
    %v928 = vld [vmem:[#allocation7 + $0x14c] sm:$0xf]
    %v929 = vld [vmem:[#allocation7 + $0x150] sm:$0xff]
    %v930 = vld [vmem:[#allocation7 + $0x158] sm:$0xf]
    %v931 = vld [vmem:[#allocation7 + $0x15c] sm:$0xff]
    %v932 = vld [vmem:[#allocation7 + $0x164] sm:$0xf]
    %v933 = vld [vmem:[#allocation7 + $0x168] sm:$0xff]
    %v934 = vld [vmem:[#allocation7 + $0x170] sm:$0xf]
    %v935 = vld [vmem:[#allocation7 + $0x174] sm:$0xff]
    %v936 = vld [vmem:[#allocation7 + $0x17c] sm:$0xf]
    %v937 = vld [vmem:[#allocation7 + $0x180] sm:$0xff]
    %v938 = vld [vmem:[#allocation7 + $0x188] sm:$0xf]
    %v939 = vld [vmem:[#allocation7 + $0x18c] sm:$0xff]
    %v940 = vld [vmem:[#allocation7 + $0x194] sm:$0xf]
    %v941 = vld [vmem:[#allocation7 + $0x198] sm:$0xff]
    %v942 = vld [vmem:[#allocation7 + $0x1a0] sm:$0xf]
    %v943 = vld [vmem:[#allocation7 + $0x1a4] sm:$0xff]
    %v944 = vld [vmem:[#allocation7 + $0x1ac] sm:$0xf]
    %v945 = vld [vmem:[#allocation7 + $0x1b0] sm:$0xff]
    %v946 = vld [vmem:[#allocation7 + $0x1b8] sm:$0xf]
    %v947 = vld [vmem:[#allocation7 + $0x1bc] sm:$0xff]
    %v948 = vld [vmem:[#allocation7 + $0x1c4] sm:$0xf]
    %v949 = vld [vmem:[#allocation7 + $0x1c8] sm:$0xff]
    %v950 = vld [vmem:[#allocation7 + $0x1d0] sm:$0xf]
    %v951 = vld [vmem:[#allocation7 + $0x1d4] sm:$0xff]
    %v952 = vld [vmem:[#allocation7 + $0x1dc] sm:$0xf]
    %v953 = vld [vmem:[#allocation7 + $0x1e0] sm:$0xff]
    %v954 = vld [vmem:[#allocation7 + $0x1e8] sm:$0xf]
    %v955 = vld [vmem:[#allocation7 + $0x1ec] sm:$0xff]
    %v956 = vld [vmem:[#allocation7 + $0x1f4] sm:$0xf]
    %v957 = vld [vmem:[#allocation7 + $0x1f8] sm:$0xff]
    %v958 = vld [vmem:[#allocation7 + $0x200] sm:$0xf]
    %v959 = vld [vmem:[#allocation7 + $0x204] sm:$0xff]
    %v960 = vld [vmem:[#allocation7 + $0x20c] sm:$0xf]
    %v961 = vld [vmem:[#allocation7 + $0x210] sm:$0xff]
    %v962 = vld [vmem:[#allocation7 + $0x218] sm:$0xf]
    %v963 = vld [vmem:[#allocation7 + $0x21c] sm:$0xff]
    %v964 = vld [vmem:[#allocation7 + $0x224] sm:$0xf]
    %v965 = vld [vmem:[#allocation7 + $0x228] sm:$0xff]
    %v966 = vld [vmem:[#allocation7 + $0x230] sm:$0xf]
    %v967 = vld [vmem:[#allocation7 + $0x234] sm:$0xff]
    %v968 = vld [vmem:[#allocation7 + $0x23c] sm:$0xf]
    %v969 = vld [vmem:[#allocation7 + $0x240] sm:$0xff]
    %v970 = vld [vmem:[#allocation7 + $0x248] sm:$0xf]
    %v971 = vld [vmem:[#allocation7 + $0x24c] sm:$0xff]
    %v972 = vld [vmem:[#allocation7 + $0x254] sm:$0xf]
    %v973 = vld [vmem:[#allocation7 + $0x258] sm:$0xff]
    %v974 = vld [vmem:[#allocation7 + $0x260] sm:$0xf]
    %v975 = vld [vmem:[#allocation7 + $0x264] sm:$0xff]
    %v976 = vld [vmem:[#allocation7 + $0x26c] sm:$0xf]
    %v977 = vld [vmem:[#allocation7 + $0x270] sm:$0xff]
    %v978 = vld [vmem:[#allocation7 + $0x278] sm:$0xf]
    %v979 = vld [vmem:[#allocation7 + $0x27c] sm:$0xff]
    %v980 = vld [vmem:[#allocation7 + $0x284] sm:$0xf]
    %v981 = vld [vmem:[#allocation7 + $0x288] sm:$0xff]
    %v982 = vld [vmem:[#allocation7 + $0x290] sm:$0xf]
    %v983 = vld [vmem:[#allocation7 + $0x294] sm:$0xff]
    %v984 = vld [vmem:[#allocation7 + $0x29c] sm:$0xf]
    %v985 = vld [vmem:[#allocation7 + $0x2a0] sm:$0xff]
    %v986 = vld [vmem:[#allocation7 + $0x2a8] sm:$0xf]
    %v987 = vld [vmem:[#allocation7 + $0x2ac] sm:$0xff]
    %v988 = vld [vmem:[#allocation7 + $0x2b4] sm:$0xf]
    %v989 = vld [vmem:[#allocation7 + $0x2b8] sm:$0xff]
    %v990 = vld [vmem:[#allocation7 + $0x2c0] sm:$0xf]
    %v991 = vld [vmem:[#allocation7 + $0x2c4] sm:$0xff]
    %v992 = vld [vmem:[#allocation7 + $0x2cc] sm:$0xf]
    %v993 = vld [vmem:[#allocation7 + $0x2d0] sm:$0xff]
    %v994 = vld [vmem:[#allocation7 + $0x2d8] sm:$0xf]
    %v995 = vld [vmem:[#allocation7 + $0x2dc] sm:$0xff]
    %v996 = vld [vmem:[#allocation7 + $0x2e4] sm:$0xf]
    %v997 = vld [vmem:[#allocation7 + $0x2e8] sm:$0xff]
    %v998 = vld [vmem:[#allocation7 + $0x2f0] sm:$0xf]
    %v999 = vld [vmem:[#allocation7 + $0x2f4] sm:$0xff]
    %v1000 = vld [vmem:[#allocation7 + $0x2fc] sm:$0xf]
    %v1001 = vld [vmem:[%s8] sm:$0x7]
    %v1002 = vpack.c.bf16 %v869, %v869
    %v1003 = vpack.c.bf16 %v870, %v870
    %v1004 = vpack.c.bf16 %v871, %v871
    %v1005 = vpack.c.bf16 %v872, %v872
    %v1007 = vperm.slane %v1001, 0
    %v1008 = vperm.slane %v1001, 1
    %v1009 = vperm.slane %v1001, 2
    %v1141 = vunpack.c.l.b16 %v873
    %v1142 = vunpack.c.h.b16 %v873
    %v1143 = vunpack.c.l.b16 %v874
    %v1144 = vunpack.c.l.b16 %v875
    %v1145 = vunpack.c.h.b16 %v875
    %v1146 = vunpack.c.l.b16 %v876
    %v1147 = vunpack.c.l.b16 %v877
    %v1148 = vunpack.c.h.b16 %v877
    %v1149 = vunpack.c.l.b16 %v878
    %v1150 = vunpack.c.l.b16 %v879
    %v1151 = vunpack.c.h.b16 %v879
    %v1152 = vunpack.c.l.b16 %v880
    %v1153 = vunpack.c.l.b16 %v881
    %v1154 = vunpack.c.h.b16 %v881
    %v1155 = vunpack.c.l.b16 %v882
    %v1156 = vunpack.c.l.b16 %v883
    %v1157 = vunpack.c.h.b16 %v883
    %v1158 = vunpack.c.l.b16 %v884
    %v1159 = vunpack.c.l.b16 %v885
    %v1160 = vunpack.c.h.b16 %v885
    %v1161 = vunpack.c.l.b16 %v886
    %v1162 = vunpack.c.l.b16 %v887
    %v1163 = vunpack.c.h.b16 %v887
    %v1164 = vunpack.c.l.b16 %v888
    %v1165 = vunpack.c.l.b16 %v889
    %v1166 = vunpack.c.h.b16 %v889
    %v1167 = vunpack.c.l.b16 %v890
    %v1168 = vunpack.c.l.b16 %v891
    %v1169 = vunpack.c.h.b16 %v891
    %v1170 = vunpack.c.l.b16 %v892
    %v1171 = vunpack.c.l.b16 %v893
    %v1172 = vunpack.c.h.b16 %v893
    %v1173 = vunpack.c.l.b16 %v894
    %v1174 = vunpack.c.l.b16 %v895
    %v1175 = vunpack.c.h.b16 %v895
    %v1176 = vunpack.c.l.b16 %v896
    %v1177 = vunpack.c.l.b16 %v897
    %v1178 = vunpack.c.h.b16 %v897
    %v1179 = vunpack.c.l.b16 %v898
    %v1180 = vunpack.c.l.b16 %v899
    %v1181 = vunpack.c.h.b16 %v899
    %v1182 = vunpack.c.l.b16 %v900
    %v1183 = vunpack.c.l.b16 %v901
    %v1184 = vunpack.c.h.b16 %v901
    %v1185 = vunpack.c.l.b16 %v902
    %v1186 = vunpack.c.l.b16 %v903
    %v1187 = vunpack.c.h.b16 %v903
    %v1188 = vunpack.c.l.b16 %v904
    %v1189 = vunpack.c.l.b16 %v905
    %v1190 = vunpack.c.h.b16 %v905
    %v1191 = vunpack.c.l.b16 %v906
    %v1192 = vunpack.c.l.b16 %v907
    %v1193 = vunpack.c.h.b16 %v907
    %v1194 = vunpack.c.l.b16 %v908
    %v1195 = vunpack.c.l.b16 %v909
    %v1196 = vunpack.c.h.b16 %v909
    %v1197 = vunpack.c.l.b16 %v910
    %v1198 = vunpack.c.l.b16 %v911
    %v1199 = vunpack.c.h.b16 %v911
    %v1200 = vunpack.c.l.b16 %v912
    %v1201 = vunpack.c.l.b16 %v913
    %v1202 = vunpack.c.h.b16 %v913
    %v1203 = vunpack.c.l.b16 %v914
    %v1204 = vunpack.c.l.b16 %v915
    %v1205 = vunpack.c.h.b16 %v915
    %v1206 = vunpack.c.l.b16 %v916
    %v1207 = vunpack.c.l.b16 %v917
    %v1208 = vunpack.c.h.b16 %v917
    %v1209 = vunpack.c.l.b16 %v918
    %v1210 = vunpack.c.l.b16 %v919
    %v1211 = vunpack.c.h.b16 %v919
    %v1212 = vunpack.c.l.b16 %v920
    %v1213 = vunpack.c.l.b16 %v921
    %v1214 = vunpack.c.h.b16 %v921
    %v1215 = vunpack.c.l.b16 %v922
    %v1216 = vunpack.c.l.b16 %v923
    %v1217 = vunpack.c.h.b16 %v923
    %v1218 = vunpack.c.l.b16 %v924
    %v1219 = vunpack.c.l.b16 %v925
    %v1220 = vunpack.c.h.b16 %v925
    %v1221 = vunpack.c.l.b16 %v926
    %v1222 = vunpack.c.l.b16 %v927
    %v1223 = vunpack.c.h.b16 %v927
    %v1224 = vunpack.c.l.b16 %v928
    %v1225 = vunpack.c.l.b16 %v929
    %v1226 = vunpack.c.h.b16 %v929
    %v1227 = vunpack.c.l.b16 %v930
    %v1228 = vunpack.c.l.b16 %v931
    %v1229 = vunpack.c.h.b16 %v931
    %v1230 = vunpack.c.l.b16 %v932
    %v1231 = vunpack.c.l.b16 %v933
    %v1232 = vunpack.c.h.b16 %v933
    %v1233 = vunpack.c.l.b16 %v934
    %v1234 = vunpack.c.l.b16 %v935
    %v1235 = vunpack.c.h.b16 %v935
    %v1236 = vunpack.c.l.b16 %v936
    %v1237 = vunpack.c.l.b16 %v937
    %v1238 = vunpack.c.h.b16 %v937
    %v1239 = vunpack.c.l.b16 %v938
    %v1240 = vunpack.c.l.b16 %v939
    %v1241 = vunpack.c.h.b16 %v939
    %v1242 = vunpack.c.l.b16 %v940
    %v1243 = vunpack.c.l.b16 %v941
    %v1244 = vunpack.c.h.b16 %v941
    %v1245 = vunpack.c.l.b16 %v942
    %v1246 = vunpack.c.l.b16 %v943
    %v1247 = vunpack.c.h.b16 %v943
    %v1248 = vunpack.c.l.b16 %v944
    %v1249 = vunpack.c.l.b16 %v945
    %v1250 = vunpack.c.h.b16 %v945
    %v1251 = vunpack.c.l.b16 %v946
    %v1252 = vunpack.c.l.b16 %v947
    %v1253 = vunpack.c.h.b16 %v947
    %v1254 = vunpack.c.l.b16 %v948
    %v1255 = vunpack.c.l.b16 %v949
    %v1256 = vunpack.c.h.b16 %v949
    %v1257 = vunpack.c.l.b16 %v950
    %v1258 = vunpack.c.l.b16 %v951
    %v1259 = vunpack.c.h.b16 %v951
    %v1260 = vunpack.c.l.b16 %v952
    %v1261 = vunpack.c.l.b16 %v953
    %v1262 = vunpack.c.h.b16 %v953
    %v1263 = vunpack.c.l.b16 %v954
    %v1264 = vunpack.c.l.b16 %v955
    %v1265 = vunpack.c.h.b16 %v955
    %v1266 = vunpack.c.l.b16 %v956
    %v1267 = vunpack.c.l.b16 %v957
    %v1268 = vunpack.c.h.b16 %v957
    %v1269 = vunpack.c.l.b16 %v958
    %v1270 = vunpack.c.l.b16 %v959
    %v1271 = vunpack.c.h.b16 %v959
    %v1272 = vunpack.c.l.b16 %v960
    %v1273 = vunpack.c.l.b16 %v961
    %v1274 = vunpack.c.h.b16 %v961
    %v1275 = vunpack.c.l.b16 %v962
    %v1276 = vunpack.c.l.b16 %v963
    %v1277 = vunpack.c.h.b16 %v963
    %v1278 = vunpack.c.l.b16 %v964
    %v1279 = vunpack.c.l.b16 %v965
    %v1280 = vunpack.c.h.b16 %v965
    %v1281 = vunpack.c.l.b16 %v966
    %v1282 = vunpack.c.l.b16 %v967
    %v1283 = vunpack.c.h.b16 %v967
    %v1284 = vunpack.c.l.b16 %v968
    %v1285 = vunpack.c.l.b16 %v969
    %v1286 = vunpack.c.h.b16 %v969
    %v1287 = vunpack.c.l.b16 %v970
    %v1288 = vunpack.c.l.b16 %v971
    %v1289 = vunpack.c.h.b16 %v971
    %v1290 = vunpack.c.l.b16 %v972
    %v1291 = vunpack.c.l.b16 %v973
    %v1292 = vunpack.c.h.b16 %v973
    %v1293 = vunpack.c.l.b16 %v974
    %v1294 = vunpack.c.l.b16 %v975
    %v1295 = vunpack.c.h.b16 %v975
    %v1296 = vunpack.c.l.b16 %v976
    %v1297 = vunpack.c.l.b16 %v977
    %v1298 = vunpack.c.h.b16 %v977
    %v1299 = vunpack.c.l.b16 %v978
    %v1300 = vunpack.c.l.b16 %v979
    %v1301 = vunpack.c.h.b16 %v979
    %v1302 = vunpack.c.l.b16 %v980
    %v1303 = vunpack.c.l.b16 %v981
    %v1304 = vunpack.c.h.b16 %v981
    %v1305 = vunpack.c.l.b16 %v982
    %v1306 = vunpack.c.l.b16 %v983
    %v1307 = vunpack.c.h.b16 %v983
    %v1308 = vunpack.c.l.b16 %v984
    %v1309 = vunpack.c.l.b16 %v985
    %v1310 = vunpack.c.h.b16 %v985
    %v1311 = vunpack.c.l.b16 %v986
    %v1312 = vunpack.c.l.b16 %v987
    %v1313 = vunpack.c.h.b16 %v987
    %v1314 = vunpack.c.l.b16 %v988
    %v1315 = vunpack.c.l.b16 %v989
    %v1316 = vunpack.c.h.b16 %v989
    %v1317 = vunpack.c.l.b16 %v990
    %v1318 = vunpack.c.l.b16 %v991
    %v1319 = vunpack.c.h.b16 %v991
    %v1320 = vunpack.c.l.b16 %v992
    %v1321 = vunpack.c.l.b16 %v993
    %v1322 = vunpack.c.h.b16 %v993
    %v1323 = vunpack.c.l.b16 %v994
    %v1324 = vunpack.c.l.b16 %v995
    %v1325 = vunpack.c.h.b16 %v995
    %v1326 = vunpack.c.l.b16 %v996
    %v1327 = vunpack.c.l.b16 %v997
    %v1328 = vunpack.c.h.b16 %v997
    %v1329 = vunpack.c.l.b16 %v998
    %v1330 = vunpack.c.l.b16 %v999
    %v1331 = vunpack.c.h.b16 %v999
    %v1332 = vunpack.c.l.b16 %v1000
    %v1333 = vpack.c.b16 %v1144, %v1141
    %v1334 = vpack.c.b16 %v1145, %v1142
    %v1335 = vpack.c.b16 %v1146, %v1143
    %v1336 = vpack.c.b16 %v1150, %v1147
    %v1337 = vpack.c.b16 %v1151, %v1148
    %v1338 = vpack.c.b16 %v1152, %v1149
    %v1339 = vpack.c.b16 %v1156, %v1153
    %v1340 = vpack.c.b16 %v1157, %v1154
    %v1341 = vpack.c.b16 %v1158, %v1155
    %v1342 = vpack.c.b16 %v1162, %v1159
    %v1343 = vpack.c.b16 %v1163, %v1160
    %v1344 = vpack.c.b16 %v1164, %v1161
    %v1345 = vpack.c.b16 %v1168, %v1165
    %v1346 = vpack.c.b16 %v1169, %v1166
    %v1347 = vpack.c.b16 %v1170, %v1167
    %v1348 = vpack.c.b16 %v1174, %v1171
    %v1349 = vpack.c.b16 %v1175, %v1172
    %v1350 = vpack.c.b16 %v1176, %v1173
    %v1351 = vpack.c.b16 %v1180, %v1177
    %v1352 = vpack.c.b16 %v1181, %v1178
    %v1353 = vpack.c.b16 %v1182, %v1179
    %v1354 = vpack.c.b16 %v1186, %v1183
    %v1355 = vpack.c.b16 %v1187, %v1184
    %v1356 = vpack.c.b16 %v1188, %v1185
    %v1357 = vpack.c.b16 %v1192, %v1189
    %v1358 = vpack.c.b16 %v1193, %v1190
    %v1359 = vpack.c.b16 %v1194, %v1191
    %v1360 = vpack.c.b16 %v1198, %v1195
    %v1361 = vpack.c.b16 %v1199, %v1196
    %v1362 = vpack.c.b16 %v1200, %v1197
    %v1363 = vpack.c.b16 %v1204, %v1201
    %v1364 = vpack.c.b16 %v1205, %v1202
    %v1365 = vpack.c.b16 %v1206, %v1203
    %v1366 = vpack.c.b16 %v1210, %v1207
    %v1367 = vpack.c.b16 %v1211, %v1208
    %v1368 = vpack.c.b16 %v1212, %v1209
    %v1369 = vpack.c.b16 %v1216, %v1213
    %v1370 = vpack.c.b16 %v1217, %v1214
    %v1371 = vpack.c.b16 %v1218, %v1215
    %v1372 = vpack.c.b16 %v1222, %v1219
    %v1373 = vpack.c.b16 %v1223, %v1220
    %v1374 = vpack.c.b16 %v1224, %v1221
    %v1375 = vpack.c.b16 %v1228, %v1225
    %v1376 = vpack.c.b16 %v1229, %v1226
    %v1377 = vpack.c.b16 %v1230, %v1227
    %v1378 = vpack.c.b16 %v1234, %v1231
    %v1379 = vpack.c.b16 %v1235, %v1232
    %v1380 = vpack.c.b16 %v1236, %v1233
    %v1381 = vpack.c.b16 %v1240, %v1237
    %v1382 = vpack.c.b16 %v1241, %v1238
    %v1383 = vpack.c.b16 %v1242, %v1239
    %v1384 = vpack.c.b16 %v1246, %v1243
    %v1385 = vpack.c.b16 %v1247, %v1244
    %v1386 = vpack.c.b16 %v1248, %v1245
    %v1387 = vpack.c.b16 %v1252, %v1249
    %v1388 = vpack.c.b16 %v1253, %v1250
    %v1389 = vpack.c.b16 %v1254, %v1251
    %v1390 = vpack.c.b16 %v1258, %v1255
    %v1391 = vpack.c.b16 %v1259, %v1256
    %v1392 = vpack.c.b16 %v1260, %v1257
    %v1393 = vpack.c.b16 %v1264, %v1261
    %v1394 = vpack.c.b16 %v1265, %v1262
    %v1395 = vpack.c.b16 %v1266, %v1263
    %v1396 = vpack.c.b16 %v1270, %v1267
    %v1397 = vpack.c.b16 %v1271, %v1268
    %v1398 = vpack.c.b16 %v1272, %v1269
    %v1399 = vpack.c.b16 %v1276, %v1273
    %v1400 = vpack.c.b16 %v1277, %v1274
    %v1401 = vpack.c.b16 %v1278, %v1275
    %v1402 = vpack.c.b16 %v1282, %v1279
    %v1403 = vpack.c.b16 %v1283, %v1280
    %v1404 = vpack.c.b16 %v1284, %v1281
    %v1405 = vpack.c.b16 %v1288, %v1285
    %v1406 = vpack.c.b16 %v1289, %v1286
    %v1407 = vpack.c.b16 %v1290, %v1287
    %v1408 = vpack.c.b16 %v1294, %v1291
    %v1409 = vpack.c.b16 %v1295, %v1292
    %v1410 = vpack.c.b16 %v1296, %v1293
    %v1411 = vpack.c.b16 %v1300, %v1297
    %v1412 = vpack.c.b16 %v1301, %v1298
    %v1413 = vpack.c.b16 %v1302, %v1299
    %v1414 = vpack.c.b16 %v1306, %v1303
    %v1415 = vpack.c.b16 %v1307, %v1304
    %v1416 = vpack.c.b16 %v1308, %v1305
    %v1417 = vpack.c.b16 %v1312, %v1309
    %v1418 = vpack.c.b16 %v1313, %v1310
    %v1419 = vpack.c.b16 %v1314, %v1311
    %v1420 = vpack.c.b16 %v1318, %v1315
    %v1421 = vpack.c.b16 %v1319, %v1316
    %v1422 = vpack.c.b16 %v1320, %v1317
    %v1423 = vpack.c.b16 %v1324, %v1321
    %v1424 = vpack.c.b16 %v1325, %v1322
    %v1425 = vpack.c.b16 %v1326, %v1323
    %v1426 = vpack.c.b16 %v1330, %v1327
    %v1427 = vpack.c.b16 %v1331, %v1328
    %v1428 = vpack.c.b16 %v1332, %v1329
    %1525 = vmatpush.bf16.msra.mxu0 %v1354
    %1526 = vmatpush.bf16.msra.mxu0 %v1351
    %1527 = vmatpush.bf16.msra.mxu0 %v1348
    %1528 = vmatpush.bf16.msra.mxu0 %v1345
    %1529 = vmatpush.bf16.msra.mxu0 %v1342
    %1530 = vmatpush.bf16.msra.mxu0 %v1339
    %1531 = vmatpush.bf16.msra.mxu0 %v1336
    %1532 = vmatpush.bf16.msra.mxu0 %v1333
    %1533 = vmatmul.bf16.gmra.mxu0 %v1002
    %v1534 = vpop.f32.mrf.mxu0
    %v1535 = vadd.f32 %v1007, %v1534
    %v1536 = vpop.f32.mrf.mxu0
    %1537 = vdwg.mxu0
    %1538 = vmatpush.bf16.msra.mxu0 %v1378
    %1539 = vmatpush.bf16.msra.mxu0 %v1375
    %1540 = vmatpush.bf16.msra.mxu0 %v1372
    %1541 = vmatpush.bf16.msra.mxu0 %v1369
    %1542 = vmatpush.bf16.msra.mxu0 %v1366
    %1543 = vmatpush.bf16.msra.mxu0 %v1363
    %1544 = vmatpush.bf16.msra.mxu0 %v1360
    %1545 = vmatpush.bf16.msra.mxu0 %v1357
    %1546 = vmatmul.bf16.gmra.mxu0 %v1003
    %v1547 = vpop.f32.mrf.mxu0
    %v1548 = vadd.f32 %v1535, %v1547
    %v1549 = vpop.f32.mrf.mxu0
    %1550 = vdwg.mxu0
    %1551 = vmatpush.bf16.msra.mxu0 %v1402
    %1552 = vmatpush.bf16.msra.mxu0 %v1399
    %1553 = vmatpush.bf16.msra.mxu0 %v1396
    %1554 = vmatpush.bf16.msra.mxu0 %v1393
    %1555 = vmatpush.bf16.msra.mxu0 %v1390
    %1556 = vmatpush.bf16.msra.mxu0 %v1387
    %1557 = vmatpush.bf16.msra.mxu0 %v1384
    %1558 = vmatpush.bf16.msra.mxu0 %v1381
    %1559 = vmatmul.bf16.gmra.mxu0 %v1004
    %v1560 = vpop.f32.mrf.mxu0
    %v1561 = vadd.f32 %v1548, %v1560
    %v1562 = vpop.f32.mrf.mxu0
    %1563 = vdwg.mxu0
    %1564 = vmatpush.bf16.msra.mxu0 %v1426
    %1565 = vmatpush.bf16.msra.mxu0 %v1423
    %1566 = vmatpush.bf16.msra.mxu0 %v1420
    %1567 = vmatpush.bf16.msra.mxu0 %v1417
    %1568 = vmatpush.bf16.msra.mxu0 %v1414
    %1569 = vmatpush.bf16.msra.mxu0 %v1411
    %1570 = vmatpush.bf16.msra.mxu0 %v1408
    %1571 = vmatpush.bf16.msra.mxu0 %v1405
    %1572 = vmatmul.bf16.gmra.mxu0 %v1005
    %v1573 = vpop.f32.mrf.mxu0
    %v1574 = vadd.f32 %v1561, %v1573
    %v1575 = vpop.f32.mrf.mxu0
    %1576 = vdwg.mxu0
    %1577 = vmatpush.bf16.msra.mxu0 %v1355
    %1578 = vmatpush.bf16.msra.mxu0 %v1352
    %1579 = vmatpush.bf16.msra.mxu0 %v1349
    %1580 = vmatpush.bf16.msra.mxu0 %v1346
    %1581 = vmatpush.bf16.msra.mxu0 %v1343
    %1582 = vmatpush.bf16.msra.mxu0 %v1340
    %1583 = vmatpush.bf16.msra.mxu0 %v1337
    %1584 = vmatpush.bf16.msra.mxu0 %v1334
    %1585 = vmatmul.bf16.gmra.mxu0 %v1002
    %v1586 = vpop.f32.mrf.mxu0
    %v1587 = vadd.f32 %v1008, %v1586
    %v1588 = vpop.f32.mrf.mxu0
    %1589 = vdwg.mxu0
    %1590 = vmatpush.bf16.msra.mxu0 %v1379
    %1591 = vmatpush.bf16.msra.mxu0 %v1376
    %1592 = vmatpush.bf16.msra.mxu0 %v1373
    %1593 = vmatpush.bf16.msra.mxu0 %v1370
    %1594 = vmatpush.bf16.msra.mxu0 %v1367
    %1595 = vmatpush.bf16.msra.mxu0 %v1364
    %1596 = vmatpush.bf16.msra.mxu0 %v1361
    %1597 = vmatpush.bf16.msra.mxu0 %v1358
    %1598 = vmatmul.bf16.gmra.mxu0 %v1003
    %v1599 = vpop.f32.mrf.mxu0
    %v1600 = vadd.f32 %v1587, %v1599
    %v1601 = vpop.f32.mrf.mxu0
    %1602 = vdwg.mxu0
    %1603 = vmatpush.bf16.msra.mxu0 %v1403
    %1604 = vmatpush.bf16.msra.mxu0 %v1400
    %1605 = vmatpush.bf16.msra.mxu0 %v1397
    %1606 = vmatpush.bf16.msra.mxu0 %v1394
    %1607 = vmatpush.bf16.msra.mxu0 %v1391
    %1608 = vmatpush.bf16.msra.mxu0 %v1388
    %1609 = vmatpush.bf16.msra.mxu0 %v1385
    %1610 = vmatpush.bf16.msra.mxu0 %v1382
    %1611 = vmatmul.bf16.gmra.mxu0 %v1004
    %v1612 = vpop.f32.mrf.mxu0
    %v1613 = vadd.f32 %v1600, %v1612
    %v1614 = vpop.f32.mrf.mxu0
    %1615 = vdwg.mxu0
    %1616 = vmatpush.bf16.msra.mxu0 %v1427
    %1617 = vmatpush.bf16.msra.mxu0 %v1424
    %1618 = vmatpush.bf16.msra.mxu0 %v1421
    %1619 = vmatpush.bf16.msra.mxu0 %v1418
    %1620 = vmatpush.bf16.msra.mxu0 %v1415
    %1621 = vmatpush.bf16.msra.mxu0 %v1412
    %1622 = vmatpush.bf16.msra.mxu0 %v1409
    %1623 = vmatpush.bf16.msra.mxu0 %v1406
    %1624 = vmatmul.bf16.gmra.mxu0 %v1005
    %v1625 = vpop.f32.mrf.mxu0
    %v1626 = vadd.f32 %v1613, %v1625
    %v1627 = vpop.f32.mrf.mxu0
    %1628 = vdwg.mxu0
    %1629 = vmatpush.bf16.msra.mxu0 %v1356
    %1630 = vmatpush.bf16.msra.mxu0 %v1353
    %1631 = vmatpush.bf16.msra.mxu0 %v1350
    %1632 = vmatpush.bf16.msra.mxu0 %v1347
    %1633 = vmatpush.bf16.msra.mxu0 %v1344
    %1634 = vmatpush.bf16.msra.mxu0 %v1341
    %1635 = vmatpush.bf16.msra.mxu0 %v1338
    %1636 = vmatpush.bf16.msra.mxu0 %v1335
    %1637 = vmatmul.bf16.gmra.mxu0 %v1002
    %v1638 = vpop.f32.mrf.mxu0
    %v1639 = vadd.f32 %v1009, %v1638
    %v1640 = vpop.f32.mrf.mxu0
    %1641 = vdwg.mxu0
    %1642 = vmatpush.bf16.msra.mxu0 %v1380
    %1643 = vmatpush.bf16.msra.mxu0 %v1377
    %1644 = vmatpush.bf16.msra.mxu0 %v1374
    %1645 = vmatpush.bf16.msra.mxu0 %v1371
    %1646 = vmatpush.bf16.msra.mxu0 %v1368
    %1647 = vmatpush.bf16.msra.mxu0 %v1365
    %1648 = vmatpush.bf16.msra.mxu0 %v1362
    %1649 = vmatpush.bf16.msra.mxu0 %v1359
    %1650 = vmatmul.bf16.gmra.mxu0 %v1003
    %v1651 = vpop.f32.mrf.mxu0
    %v1652 = vadd.f32 %v1639, %v1651
    %v1653 = vpop.f32.mrf.mxu0
    %1654 = vdwg.mxu0
    %1655 = vmatpush.bf16.msra.mxu0 %v1404
    %1656 = vmatpush.bf16.msra.mxu0 %v1401
    %1657 = vmatpush.bf16.msra.mxu0 %v1398
    %1658 = vmatpush.bf16.msra.mxu0 %v1395
    %1659 = vmatpush.bf16.msra.mxu0 %v1392
    %1660 = vmatpush.bf16.msra.mxu0 %v1389
    %1661 = vmatpush.bf16.msra.mxu0 %v1386
    %1662 = vmatpush.bf16.msra.mxu0 %v1383
    %1663 = vmatmul.bf16.gmra.mxu0 %v1004
    %v1664 = vpop.f32.mrf.mxu0
    %v1665 = vadd.f32 %v1652, %v1664
    %v1666 = vpop.f32.mrf.mxu0
    %1667 = vdwg.mxu0
    %1668 = vmatpush.bf16.msra.mxu0 %v1428
    %1669 = vmatpush.bf16.msra.mxu0 %v1425
    %1670 = vmatpush.bf16.msra.mxu0 %v1422
    %1671 = vmatpush.bf16.msra.mxu0 %v1419
    %1672 = vmatpush.bf16.msra.mxu0 %v1416
    %1673 = vmatpush.bf16.msra.mxu0 %v1413
    %1674 = vmatpush.bf16.msra.mxu0 %v1410
    %1675 = vmatpush.bf16.msra.mxu0 %v1407
    %1676 = vmatmul.bf16.gmra.mxu0 %v1005
    %v1677 = vpop.f32.mrf.mxu0
    %v1678 = vadd.f32 %v1665, %v1677
    %v1679 = vpop.f32.mrf.mxu0
    %1680 = vdwg.mxu0
    %v1681 = vmul.f32 %v1574, 0.01
    %v1682 = vmul.f32 %v1626, 0.01
    %v1683 = vmul.f32 %v1678, 0.01
    %v1684 = vmax.f32 %v1574, %v1681
    %v1685 = vmax.f32 %v1626, %v1682
    %v1686 = vmax.f32 %v1678, %v1683
    %v1687 = vld [vmem:[#allocation9] sm:$0xff]
    %v1688 = vld [vmem:[#allocation9 + $0x8] sm:$0xff]
    %v1689 = vld [vmem:[#allocation9 + $0x10] sm:$0xff]
    %v1690 = vld [vmem:[#allocation9 + $0x18] sm:$0xff]
    %v1691 = vld [vmem:[#allocation9 + $0x20] sm:$0xff]
    %v1692 = vld [vmem:[#allocation9 + $0x28] sm:$0xff]
    %v1693 = vld [vmem:[#allocation9 + $0x30] sm:$0xff]
    %v1694 = vld [vmem:[#allocation9 + $0x38] sm:$0xff]
    %v1695 = vld [vmem:[#allocation9 + $0x40] sm:$0xff]
    %v1696 = vld [vmem:[#allocation9 + $0x48] sm:$0xff]
    %v1697 = vld [vmem:[#allocation9 + $0x50] sm:$0xff]
    %v1698 = vld [vmem:[#allocation9 + $0x58] sm:$0xff]
    %v1699 = vld [vmem:[#allocation9 + $0x60] sm:$0xff]
    %v1700 = vld [vmem:[#allocation9 + $0x68] sm:$0xff]
    %v1701 = vld [vmem:[#allocation9 + $0x70] sm:$0xff]
    %v1702 = vld [vmem:[#allocation9 + $0x78] sm:$0xff]
    %v1703 = vld [vmem:[#allocation9 + $0x80] sm:$0xff]
    %v1704 = vld [vmem:[#allocation9 + $0x88] sm:$0xff]
    %v1705 = vld [vmem:[#allocation9 + $0x90] sm:$0xff]
    %v1706 = vld [vmem:[#allocation9 + $0x98] sm:$0xff]
    %v1707 = vld [vmem:[#allocation9 + $0xa0] sm:$0xff]
    %v1708 = vld [vmem:[#allocation9 + $0xa8] sm:$0xff]
    %v1709 = vld [vmem:[#allocation9 + $0xb0] sm:$0xff]
    %v1710 = vld [vmem:[#allocation9 + $0xb8] sm:$0xff]
    %v1711 = vld [vmem:[#allocation9 + $0xc0] sm:$0xff]
    %v1712 = vld [vmem:[#allocation9 + $0xc8] sm:$0xff]
    %v1713 = vld [vmem:[#allocation9 + $0xd0] sm:$0xff]
    %v1714 = vld [vmem:[#allocation9 + $0xd8] sm:$0xff]
    %v1715 = vld [vmem:[#allocation9 + $0xe0] sm:$0xff]
    %v1716 = vld [vmem:[#allocation9 + $0xe8] sm:$0xff]
    %v1717 = vld [vmem:[#allocation9 + $0xf0] sm:$0xff]
    %v1718 = vld [vmem:[#allocation9 + $0xf8] sm:$0xff]
    %v1719 = vld [vmem:[#allocation9 + $0x100] sm:$0xff]
    %v1720 = vld [vmem:[#allocation9 + $0x108] sm:$0xff]
    %v1721 = vld [vmem:[#allocation9 + $0x110] sm:$0xff]
    %v1722 = vld [vmem:[#allocation9 + $0x118] sm:$0xff]
    %v1723 = vld [vmem:[#allocation9 + $0x120] sm:$0xff]
    %v1724 = vld [vmem:[#allocation9 + $0x128] sm:$0xff]
    %v1725 = vld [vmem:[#allocation9 + $0x130] sm:$0xff]
    %v1726 = vld [vmem:[#allocation9 + $0x138] sm:$0xff]
    %v1727 = vld [vmem:[#allocation9 + $0x140] sm:$0xff]
    %v1728 = vld [vmem:[#allocation9 + $0x148] sm:$0xff]
    %v1729 = vld [vmem:[#allocation9 + $0x150] sm:$0xff]
    %v1730 = vld [vmem:[#allocation9 + $0x158] sm:$0xff]
    %v1731 = vld [vmem:[#allocation9 + $0x160] sm:$0xff]
    %v1732 = vld [vmem:[#allocation9 + $0x168] sm:$0xff]
    %v1733 = vld [vmem:[#allocation9 + $0x170] sm:$0xff]
    %v1734 = vld [vmem:[#allocation9 + $0x178] sm:$0xff]
    %v1735 = vld [vmem:[%s10] sm:$0x3]
    %v1736 = vpack.c.bf16 %v1684, %v1684
    %v1737 = vpack.c.bf16 %v1685, %v1685
    %v1738 = vpack.c.bf16 %v1686, %v1686
    %v1740 = vperm.slane %v1735, 0
    %v1741 = vperm.slane %v1735, 1
    %v1792 = vunpack.c.l.b16 %v1687
    %v1793 = vunpack.c.h.b16 %v1687
    %v1794 = vunpack.c.l.b16 %v1688
    %v1795 = vunpack.c.h.b16 %v1688
    %v1796 = vunpack.c.l.b16 %v1689
    %v1797 = vunpack.c.h.b16 %v1689
    %v1798 = vunpack.c.l.b16 %v1690
    %v1799 = vunpack.c.h.b16 %v1690
    %v1800 = vunpack.c.l.b16 %v1691
    %v1801 = vunpack.c.h.b16 %v1691
    %v1802 = vunpack.c.l.b16 %v1692
    %v1803 = vunpack.c.h.b16 %v1692
    %v1804 = vunpack.c.l.b16 %v1693
    %v1805 = vunpack.c.h.b16 %v1693
    %v1806 = vunpack.c.l.b16 %v1694
    %v1807 = vunpack.c.h.b16 %v1694
    %v1808 = vunpack.c.l.b16 %v1695
    %v1809 = vunpack.c.h.b16 %v1695
    %v1810 = vunpack.c.l.b16 %v1696
    %v1811 = vunpack.c.h.b16 %v1696
    %v1812 = vunpack.c.l.b16 %v1697
    %v1813 = vunpack.c.h.b16 %v1697
    %v1814 = vunpack.c.l.b16 %v1698
    %v1815 = vunpack.c.h.b16 %v1698
    %v1816 = vunpack.c.l.b16 %v1699
    %v1817 = vunpack.c.h.b16 %v1699
    %v1818 = vunpack.c.l.b16 %v1700
    %v1819 = vunpack.c.h.b16 %v1700
    %v1820 = vunpack.c.l.b16 %v1701
    %v1821 = vunpack.c.h.b16 %v1701
    %v1822 = vunpack.c.l.b16 %v1702
    %v1823 = vunpack.c.h.b16 %v1702
    %v1824 = vunpack.c.l.b16 %v1703
    %v1825 = vunpack.c.h.b16 %v1703
    %v1826 = vunpack.c.l.b16 %v1704
    %v1827 = vunpack.c.h.b16 %v1704
    %v1828 = vunpack.c.l.b16 %v1705
    %v1829 = vunpack.c.h.b16 %v1705
    %v1830 = vunpack.c.l.b16 %v1706
    %v1831 = vunpack.c.h.b16 %v1706
    %v1832 = vunpack.c.l.b16 %v1707
    %v1833 = vunpack.c.h.b16 %v1707
    %v1834 = vunpack.c.l.b16 %v1708
    %v1835 = vunpack.c.h.b16 %v1708
    %v1836 = vunpack.c.l.b16 %v1709
    %v1837 = vunpack.c.h.b16 %v1709
    %v1838 = vunpack.c.l.b16 %v1710
    %v1839 = vunpack.c.h.b16 %v1710
    %v1840 = vunpack.c.l.b16 %v1711
    %v1841 = vunpack.c.h.b16 %v1711
    %v1842 = vunpack.c.l.b16 %v1712
    %v1843 = vunpack.c.h.b16 %v1712
    %v1844 = vunpack.c.l.b16 %v1713
    %v1845 = vunpack.c.h.b16 %v1713
    %v1846 = vunpack.c.l.b16 %v1714
    %v1847 = vunpack.c.h.b16 %v1714
    %v1848 = vunpack.c.l.b16 %v1715
    %v1849 = vunpack.c.h.b16 %v1715
    %v1850 = vunpack.c.l.b16 %v1716
    %v1851 = vunpack.c.h.b16 %v1716
    %v1852 = vunpack.c.l.b16 %v1717
    %v1853 = vunpack.c.h.b16 %v1717
    %v1854 = vunpack.c.l.b16 %v1718
    %v1855 = vunpack.c.h.b16 %v1718
    %v1856 = vunpack.c.l.b16 %v1719
    %v1857 = vunpack.c.h.b16 %v1719
    %v1858 = vunpack.c.l.b16 %v1720
    %v1859 = vunpack.c.h.b16 %v1720
    %v1860 = vunpack.c.l.b16 %v1721
    %v1861 = vunpack.c.h.b16 %v1721
    %v1862 = vunpack.c.l.b16 %v1722
    %v1863 = vunpack.c.h.b16 %v1722
    %v1864 = vunpack.c.l.b16 %v1723
    %v1865 = vunpack.c.h.b16 %v1723
    %v1866 = vunpack.c.l.b16 %v1724
    %v1867 = vunpack.c.h.b16 %v1724
    %v1868 = vunpack.c.l.b16 %v1725
    %v1869 = vunpack.c.h.b16 %v1725
    %v1870 = vunpack.c.l.b16 %v1726
    %v1871 = vunpack.c.h.b16 %v1726
    %v1872 = vunpack.c.l.b16 %v1727
    %v1873 = vunpack.c.h.b16 %v1727
    %v1874 = vunpack.c.l.b16 %v1728
    %v1875 = vunpack.c.h.b16 %v1728
    %v1876 = vunpack.c.l.b16 %v1729
    %v1877 = vunpack.c.h.b16 %v1729
    %v1878 = vunpack.c.l.b16 %v1730
    %v1879 = vunpack.c.h.b16 %v1730
    %v1880 = vunpack.c.l.b16 %v1731
    %v1881 = vunpack.c.h.b16 %v1731
    %v1882 = vunpack.c.l.b16 %v1732
    %v1883 = vunpack.c.h.b16 %v1732
    %v1884 = vunpack.c.l.b16 %v1733
    %v1885 = vunpack.c.h.b16 %v1733
    %v1886 = vunpack.c.l.b16 %v1734
    %v1887 = vunpack.c.h.b16 %v1734
    %v1888 = vpack.c.b16 %v1794, %v1792
    %v1889 = vpack.c.b16 %v1795, %v1793
    %v1890 = vpack.c.b16 %v1798, %v1796
    %v1891 = vpack.c.b16 %v1799, %v1797
    %v1892 = vpack.c.b16 %v1802, %v1800
    %v1893 = vpack.c.b16 %v1803, %v1801
    %v1894 = vpack.c.b16 %v1806, %v1804
    %v1895 = vpack.c.b16 %v1807, %v1805
    %v1896 = vpack.c.b16 %v1810, %v1808
    %v1897 = vpack.c.b16 %v1811, %v1809
    %v1898 = vpack.c.b16 %v1814, %v1812
    %v1899 = vpack.c.b16 %v1815, %v1813
    %v1900 = vpack.c.b16 %v1818, %v1816
    %v1901 = vpack.c.b16 %v1819, %v1817
    %v1902 = vpack.c.b16 %v1822, %v1820
    %v1903 = vpack.c.b16 %v1823, %v1821
    %v1904 = vpack.c.b16 %v1826, %v1824
    %v1905 = vpack.c.b16 %v1827, %v1825
    %v1906 = vpack.c.b16 %v1830, %v1828
    %v1907 = vpack.c.b16 %v1831, %v1829
    %v1908 = vpack.c.b16 %v1834, %v1832
    %v1909 = vpack.c.b16 %v1835, %v1833
    %v1910 = vpack.c.b16 %v1838, %v1836
    %v1911 = vpack.c.b16 %v1839, %v1837
    %v1912 = vpack.c.b16 %v1842, %v1840
    %v1913 = vpack.c.b16 %v1843, %v1841
    %v1914 = vpack.c.b16 %v1846, %v1844
    %v1915 = vpack.c.b16 %v1847, %v1845
    %v1916 = vpack.c.b16 %v1850, %v1848
    %v1917 = vpack.c.b16 %v1851, %v1849
    %v1918 = vpack.c.b16 %v1854, %v1852
    %v1919 = vpack.c.b16 %v1855, %v1853
    %v1920 = vpack.c.b16 %v1858, %v1856
    %v1921 = vpack.c.b16 %v1859, %v1857
    %v1922 = vpack.c.b16 %v1862, %v1860
    %v1923 = vpack.c.b16 %v1863, %v1861
    %v1924 = vpack.c.b16 %v1866, %v1864
    %v1925 = vpack.c.b16 %v1867, %v1865
    %v1926 = vpack.c.b16 %v1870, %v1868
    %v1927 = vpack.c.b16 %v1871, %v1869
    %v1928 = vpack.c.b16 %v1874, %v1872
    %v1929 = vpack.c.b16 %v1875, %v1873
    %v1930 = vpack.c.b16 %v1878, %v1876
    %v1931 = vpack.c.b16 %v1879, %v1877
    %v1932 = vpack.c.b16 %v1882, %v1880
    %v1933 = vpack.c.b16 %v1883, %v1881
    %v1934 = vpack.c.b16 %v1886, %v1884
    %v1935 = vpack.c.b16 %v1887, %v1885
    %1984 = vmatpush.bf16.msra.mxu0 %v1902
    %1985 = vmatpush.bf16.msra.mxu0 %v1900
    %1986 = vmatpush.bf16.msra.mxu0 %v1898
    %1987 = vmatpush.bf16.msra.mxu0 %v1896
    %1988 = vmatpush.bf16.msra.mxu0 %v1894
    %1989 = vmatpush.bf16.msra.mxu0 %v1892
    %1990 = vmatpush.bf16.msra.mxu0 %v1890
    %1991 = vmatpush.bf16.msra.mxu0 %v1888
    %1992 = vmatmul.bf16.gmra.mxu0 %v1736
    %v1993 = vpop.f32.mrf.mxu0
    %v1994 = vadd.f32 %v1740, %v1993
    %v1995 = vpop.f32.mrf.mxu0
    %1996 = vdwg.mxu0
    %1997 = vmatpush.bf16.msra.mxu0 %v1918
    %1998 = vmatpush.bf16.msra.mxu0 %v1916
    %1999 = vmatpush.bf16.msra.mxu0 %v1914
    %2000 = vmatpush.bf16.msra.mxu0 %v1912
    %2001 = vmatpush.bf16.msra.mxu0 %v1910
    %2002 = vmatpush.bf16.msra.mxu0 %v1908
    %2003 = vmatpush.bf16.msra.mxu0 %v1906
    %2004 = vmatpush.bf16.msra.mxu0 %v1904
    %2005 = vmatmul.bf16.gmra.mxu0 %v1737
    %v2006 = vpop.f32.mrf.mxu0
    %v2007 = vadd.f32 %v1994, %v2006
    %v2008 = vpop.f32.mrf.mxu0
    %2009 = vdwg.mxu0
    %2010 = vmatpush.bf16.msra.mxu0 %v1934
    %2011 = vmatpush.bf16.msra.mxu0 %v1932
    %2012 = vmatpush.bf16.msra.mxu0 %v1930
    %2013 = vmatpush.bf16.msra.mxu0 %v1928
    %2014 = vmatpush.bf16.msra.mxu0 %v1926
    %2015 = vmatpush.bf16.msra.mxu0 %v1924
    %2016 = vmatpush.bf16.msra.mxu0 %v1922
    %2017 = vmatpush.bf16.msra.mxu0 %v1920
    %2018 = vmatmul.bf16.gmra.mxu0 %v1738
    %v2019 = vpop.f32.mrf.mxu0
    %v2020 = vadd.f32 %v2007, %v2019
    %v2021 = vpop.f32.mrf.mxu0
    %2022 = vdwg.mxu0
    %2023 = vmatpush.bf16.msra.mxu0 %v1903
    %2024 = vmatpush.bf16.msra.mxu0 %v1901
    %2025 = vmatpush.bf16.msra.mxu0 %v1899
    %2026 = vmatpush.bf16.msra.mxu0 %v1897
    %2027 = vmatpush.bf16.msra.mxu0 %v1895
    %2028 = vmatpush.bf16.msra.mxu0 %v1893
    %2029 = vmatpush.bf16.msra.mxu0 %v1891
    %2030 = vmatpush.bf16.msra.mxu0 %v1889
    %2031 = vmatmul.bf16.gmra.mxu0 %v1736
    %v2032 = vpop.f32.mrf.mxu0
    %v2033 = vadd.f32 %v1741, %v2032
    %v2034 = vpop.f32.mrf.mxu0
    %2035 = vdwg.mxu0
    %2036 = vmatpush.bf16.msra.mxu0 %v1919
    %2037 = vmatpush.bf16.msra.mxu0 %v1917
    %2038 = vmatpush.bf16.msra.mxu0 %v1915
    %2039 = vmatpush.bf16.msra.mxu0 %v1913
    %2040 = vmatpush.bf16.msra.mxu0 %v1911
    %2041 = vmatpush.bf16.msra.mxu0 %v1909
    %2042 = vmatpush.bf16.msra.mxu0 %v1907
    %2043 = vmatpush.bf16.msra.mxu0 %v1905
    %2044 = vmatmul.bf16.gmra.mxu0 %v1737
    %v2045 = vpop.f32.mrf.mxu0
    %v2046 = vadd.f32 %v2033, %v2045
    %v2047 = vpop.f32.mrf.mxu0
    %2048 = vdwg.mxu0
    %2049 = vmatpush.bf16.msra.mxu0 %v1935
    %2050 = vmatpush.bf16.msra.mxu0 %v1933
    %2051 = vmatpush.bf16.msra.mxu0 %v1931
    %2052 = vmatpush.bf16.msra.mxu0 %v1929
    %2053 = vmatpush.bf16.msra.mxu0 %v1927
    %2054 = vmatpush.bf16.msra.mxu0 %v1925
    %2055 = vmatpush.bf16.msra.mxu0 %v1923
    %2056 = vmatpush.bf16.msra.mxu0 %v1921
    %2057 = vmatmul.bf16.gmra.mxu0 %v1738
    %v2058 = vpop.f32.mrf.mxu0
    %v2059 = vadd.f32 %v2046, %v2058
    %v2060 = vpop.f32.mrf.mxu0
    %2061 = vdwg.mxu0
    %v2062 = vmul.f32 %v2020, 0.01
    %v2063 = vmul.f32 %v2059, 0.01
    %v2064 = vmax.f32 %v2020, %v2062
    %v2065 = vmax.f32 %v2059, %v2063
    %v2066 = vld [vmem:[#allocation10] sm:$0xf]
    %v2067 = vld [vmem:[#allocation10 + $0x4] sm:$0xf]
    %v2068 = vld [vmem:[#allocation10 + $0x8] sm:$0xf]
    %v2069 = vld [vmem:[#allocation10 + $0xc] sm:$0xf]
    %v2070 = vld [vmem:[#allocation10 + $0x10] sm:$0xf]
    %v2071 = vld [vmem:[#allocation10 + $0x14] sm:$0xf]
    %v2072 = vld [vmem:[#allocation10 + $0x18] sm:$0xf]
    %v2073 = vld [vmem:[#allocation10 + $0x1c] sm:$0xf]
    %v2074 = vld [vmem:[#allocation10 + $0x20] sm:$0xf]
    %v2075 = vld [vmem:[#allocation10 + $0x24] sm:$0xf]
    %v2076 = vld [vmem:[#allocation10 + $0x28] sm:$0xf]
    %v2077 = vld [vmem:[#allocation10 + $0x2c] sm:$0xf]
    %v2078 = vld [vmem:[#allocation10 + $0x30] sm:$0xf]
    %v2079 = vld [vmem:[#allocation10 + $0x34] sm:$0xf]
    %v2080 = vld [vmem:[#allocation10 + $0x38] sm:$0xf]
    %v2081 = vld [vmem:[#allocation10 + $0x3c] sm:$0xf]
    %v2082 = vld [vmem:[#allocation10 + $0x40] sm:$0xf]
    %v2083 = vld [vmem:[#allocation10 + $0x44] sm:$0xf]
    %v2084 = vld [vmem:[#allocation10 + $0x48] sm:$0xf]
    %v2085 = vld [vmem:[#allocation10 + $0x4c] sm:$0xf]
    %v2086 = vld [vmem:[#allocation10 + $0x50] sm:$0xf]
    %v2087 = vld [vmem:[#allocation10 + $0x54] sm:$0xf]
    %v2088 = vld [vmem:[#allocation10 + $0x58] sm:$0xf]
    %v2089 = vld [vmem:[#allocation10 + $0x5c] sm:$0xf]
    %v2090 = vld [vmem:[#allocation10 + $0x60] sm:$0xf]
    %v2091 = vld [vmem:[#allocation10 + $0x64] sm:$0xf]
    %v2092 = vld [vmem:[#allocation10 + $0x68] sm:$0xf]
    %v2093 = vld [vmem:[#allocation10 + $0x6c] sm:$0xf]
    %v2094 = vld [vmem:[#allocation10 + $0x70] sm:$0xf]
    %v2095 = vld [vmem:[#allocation10 + $0x74] sm:$0xf]
    %v2096 = vld [vmem:[#allocation10 + $0x78] sm:$0xf]
    %v2097 = vld [vmem:[#allocation10 + $0x7c] sm:$0xf]
    %v2098 = vld [vmem:[%s12] sm:$0x1]
    %v2099 = vpack.c.bf16 %v2064, %v2064
    %v2100 = vpack.c.bf16 %v2065, %v2065
    %v2102 = vperm.slane %v2098, 0
    %v2136 = vunpack.c.l.b16 %v2066
    %v2137 = vunpack.c.l.b16 %v2067
    %v2138 = vunpack.c.l.b16 %v2068
    %v2139 = vunpack.c.l.b16 %v2069
    %v2140 = vunpack.c.l.b16 %v2070
    %v2141 = vunpack.c.l.b16 %v2071
    %v2142 = vunpack.c.l.b16 %v2072
    %v2143 = vunpack.c.l.b16 %v2073
    %v2144 = vunpack.c.l.b16 %v2074
    %v2145 = vunpack.c.l.b16 %v2075
    %v2146 = vunpack.c.l.b16 %v2076
    %v2147 = vunpack.c.l.b16 %v2077
    %v2148 = vunpack.c.l.b16 %v2078
    %v2149 = vunpack.c.l.b16 %v2079
    %v2150 = vunpack.c.l.b16 %v2080
    %v2151 = vunpack.c.l.b16 %v2081
    %v2152 = vunpack.c.l.b16 %v2082
    %v2153 = vunpack.c.l.b16 %v2083
    %v2154 = vunpack.c.l.b16 %v2084
    %v2155 = vunpack.c.l.b16 %v2085
    %v2156 = vunpack.c.l.b16 %v2086
    %v2157 = vunpack.c.l.b16 %v2087
    %v2158 = vunpack.c.l.b16 %v2088
    %v2159 = vunpack.c.l.b16 %v2089
    %v2160 = vunpack.c.l.b16 %v2090
    %v2161 = vunpack.c.l.b16 %v2091
    %v2162 = vunpack.c.l.b16 %v2092
    %v2163 = vunpack.c.l.b16 %v2093
    %v2164 = vunpack.c.l.b16 %v2094
    %v2165 = vunpack.c.l.b16 %v2095
    %v2166 = vunpack.c.l.b16 %v2096
    %v2167 = vunpack.c.l.b16 %v2097
    %v2168 = vpack.c.b16 %v2137, %v2136
    %v2169 = vpack.c.b16 %v2139, %v2138
    %v2170 = vpack.c.b16 %v2141, %v2140
    %v2171 = vpack.c.b16 %v2143, %v2142
    %v2172 = vpack.c.b16 %v2145, %v2144
    %v2173 = vpack.c.b16 %v2147, %v2146
    %v2174 = vpack.c.b16 %v2149, %v2148
    %v2175 = vpack.c.b16 %v2151, %v2150
    %v2176 = vpack.c.b16 %v2153, %v2152
    %v2177 = vpack.c.b16 %v2155, %v2154
    %v2178 = vpack.c.b16 %v2157, %v2156
    %v2179 = vpack.c.b16 %v2159, %v2158
    %v2180 = vpack.c.b16 %v2161, %v2160
    %v2181 = vpack.c.b16 %v2163, %v2162
    %v2182 = vpack.c.b16 %v2165, %v2164
    %v2183 = vpack.c.b16 %v2167, %v2166
    %2200 = vmatpush.bf16.msra.mxu0 %v2175
    %2201 = vmatpush.bf16.msra.mxu0 %v2174
    %2202 = vmatpush.bf16.msra.mxu0 %v2173
    %2203 = vmatpush.bf16.msra.mxu0 %v2172
    %2204 = vmatpush.bf16.msra.mxu0 %v2171
    %2205 = vmatpush.bf16.msra.mxu0 %v2170
    %2206 = vmatpush.bf16.msra.mxu0 %v2169
    %2207 = vmatpush.bf16.msra.mxu0 %v2168
    %2208 = vmatmul.bf16.gmra.mxu0 %v2099
    %v2209 = vpop.f32.mrf.mxu0
    %v2210 = vadd.f32 %v2102, %v2209
    %v2211 = vpop.f32.mrf.mxu0
    %2212 = vdwg.mxu0
    %2213 = vmatpush.bf16.msra.mxu0 %v2183
    %2214 = vmatpush.bf16.msra.mxu0 %v2182
    %2215 = vmatpush.bf16.msra.mxu0 %v2181
    %2216 = vmatpush.bf16.msra.mxu0 %v2180
    %2217 = vmatpush.bf16.msra.mxu0 %v2179
    %2218 = vmatpush.bf16.msra.mxu0 %v2178
    %2219 = vmatpush.bf16.msra.mxu0 %v2177
    %2220 = vmatpush.bf16.msra.mxu0 %v2176
    %2221 = vmatmul.bf16.gmra.mxu0 %v2100
    %v2222 = vpop.f32.mrf.mxu0
    %v2223 = vadd.f32 %v2210, %v2222
    %v2224 = vpop.f32.mrf.mxu0
    %2225 = vdwg.mxu0
    %v2226 = vmul.f32 %v2223, 0.01
    %v2227 = vmax.f32 %v2223, %v2226
    %v2228 = vld [vmem:[#allocation12] sm:$0xf]
    %v2229 = vld [vmem:[#allocation12 + $0x4] sm:$0xf]
    %v2230 = vld [vmem:[#allocation12 + $0x8] sm:$0xf]
    %v2231 = vld [vmem:[#allocation12 + $0xc] sm:$0xf]
    %v2232 = vld [vmem:[#allocation12 + $0x10] sm:$0xf]
    %v2233 = vld [vmem:[#allocation12 + $0x14] sm:$0xf]
    %v2234 = vld [vmem:[#allocation12 + $0x18] sm:$0xf]
    %v2235 = vld [vmem:[#allocation12 + $0x1c] sm:$0xf]
    %v2236 = vld [vmem:[#allocation12 + $0x20] sm:$0xf]
    %v2237 = vld [vmem:[#allocation12 + $0x24] sm:$0xf]
    %v2238 = vld [vmem:[#allocation12 + $0x28] sm:$0xf]
    %v2239 = vld [vmem:[#allocation12 + $0x2c] sm:$0xf]
    %v2240 = vld [vmem:[#allocation12 + $0x30] sm:$0xf]
    %v2241 = vld [vmem:[#allocation12 + $0x34] sm:$0xf]
    %v2242 = vld [vmem:[#allocation12 + $0x38] sm:$0xf]
    %v2243 = vld [vmem:[#allocation12 + $0x3c] sm:$0xf]
    %v2244 = vld [vmem:[%s14] sm:$0x1]
    %v2245 = vpack.c.bf16 %v2227, %v2227
    %v2247 = vperm.slane %v2244, 0
    %v2265 = vunpack.c.l.b16 %v2228
    %v2266 = vunpack.c.l.b16 %v2229
    %v2267 = vunpack.c.l.b16 %v2230
    %v2268 = vunpack.c.l.b16 %v2231
    %v2269 = vunpack.c.l.b16 %v2232
    %v2270 = vunpack.c.l.b16 %v2233
    %v2271 = vunpack.c.l.b16 %v2234
    %v2272 = vunpack.c.l.b16 %v2235
    %v2273 = vunpack.c.l.b16 %v2236
    %v2274 = vunpack.c.l.b16 %v2237
    %v2275 = vunpack.c.l.b16 %v2238
    %v2276 = vunpack.c.l.b16 %v2239
    %v2277 = vunpack.c.l.b16 %v2240
    %v2278 = vunpack.c.l.b16 %v2241
    %v2279 = vunpack.c.l.b16 %v2242
    %v2280 = vunpack.c.l.b16 %v2243
    %v2281 = vpack.c.b16 %v2266, %v2265
    %v2282 = vpack.c.b16 %v2268, %v2267
    %v2283 = vpack.c.b16 %v2270, %v2269
    %v2284 = vpack.c.b16 %v2272, %v2271
    %v2285 = vpack.c.b16 %v2274, %v2273
    %v2286 = vpack.c.b16 %v2276, %v2275
    %v2287 = vpack.c.b16 %v2278, %v2277
    %v2288 = vpack.c.b16 %v2280, %v2279
    %2297 = vmatpush.bf16.msra.mxu0 %v2288
    %2298 = vmatpush.bf16.msra.mxu0 %v2287
    %2299 = vmatpush.bf16.msra.mxu0 %v2286
    %2300 = vmatpush.bf16.msra.mxu0 %v2285
    %2301 = vmatpush.bf16.msra.mxu0 %v2284
    %2302 = vmatpush.bf16.msra.mxu0 %v2283
    %2303 = vmatpush.bf16.msra.mxu0 %v2282
    %2304 = vmatpush.bf16.msra.mxu0 %v2281
    %2305 = vmatmul.bf16.gmra.mxu0 %v2245
    %v2306 = vpop.f32.mrf.mxu0
    %v2307 = vadd.f32 %v2247, %v2306
    %v2308 = vpop.f32.mrf.mxu0
    %2309 = vdwg.mxu0
    %v2310 = vmul.f32 %v2307, 0.01
    %v2311 = vmax.f32 %v2307, %v2310
    %v2312 = vld [vmem:[#allocation13] sm:$0xf]
    %v2313 = vld [vmem:[#allocation13 + $0x4] sm:$0xf]
    %v2314 = vld [vmem:[#allocation13 + $0x8] sm:$0xf]
    %v2315 = vld [vmem:[#allocation13 + $0xc] sm:$0xf]
    %v2316 = vld [vmem:[#allocation13 + $0x10] sm:$0xf]
    %v2317 = vld [vmem:[#allocation13 + $0x14] sm:$0xf]
    %v2318 = vld [vmem:[#allocation13 + $0x18] sm:$0xf]
    %v2319 = vld [vmem:[#allocation13 + $0x1c] sm:$0xf]
    %v2320 = vld [vmem:[#allocation13 + $0x20] sm:$0xf]
    %v2321 = vld [vmem:[#allocation13 + $0x24] sm:$0xf]
    %v2322 = vld [vmem:[#allocation13 + $0x28] sm:$0xf]
    %v2323 = vld [vmem:[#allocation13 + $0x2c] sm:$0xf]
    %v2324 = vld [vmem:[#allocation13 + $0x30] sm:$0xf]
    %v2325 = vld [vmem:[#allocation13 + $0x34] sm:$0xf]
    %v2326 = vld [vmem:[#allocation13 + $0x38] sm:$0xf]
    %v2327 = vld [vmem:[#allocation13 + $0x3c] sm:$0xf]
    %v2328 = vld [vmem:[%s16] sm:$0x1]
    %v2329 = vpack.c.bf16 %v2311, %v2311
    %v2331 = vperm.slane %v2328, 0
    %v2349 = vunpack.c.l.b16 %v2312
    %v2350 = vunpack.c.l.b16 %v2313
    %v2351 = vunpack.c.l.b16 %v2314
    %v2352 = vunpack.c.l.b16 %v2315
    %v2353 = vunpack.c.l.b16 %v2316
    %v2354 = vunpack.c.l.b16 %v2317
    %v2355 = vunpack.c.l.b16 %v2318
    %v2356 = vunpack.c.l.b16 %v2319
    %v2357 = vunpack.c.l.b16 %v2320
    %v2358 = vunpack.c.l.b16 %v2321
    %v2359 = vunpack.c.l.b16 %v2322
    %v2360 = vunpack.c.l.b16 %v2323
    %v2361 = vunpack.c.l.b16 %v2324
    %v2362 = vunpack.c.l.b16 %v2325
    %v2363 = vunpack.c.l.b16 %v2326
    %v2364 = vunpack.c.l.b16 %v2327
    %v2365 = vpack.c.b16 %v2350, %v2349
    %v2366 = vpack.c.b16 %v2352, %v2351
    %v2367 = vpack.c.b16 %v2354, %v2353
    %v2368 = vpack.c.b16 %v2356, %v2355
    %v2369 = vpack.c.b16 %v2358, %v2357
    %v2370 = vpack.c.b16 %v2360, %v2359
    %v2371 = vpack.c.b16 %v2362, %v2361
    %v2372 = vpack.c.b16 %v2364, %v2363
    %2381 = vmatpush.bf16.msra.mxu0 %v2372
    %2382 = vmatpush.bf16.msra.mxu0 %v2371
    %2383 = vmatpush.bf16.msra.mxu0 %v2370
    %2384 = vmatpush.bf16.msra.mxu0 %v2369
    %2385 = vmatpush.bf16.msra.mxu0 %v2368
    %2386 = vmatpush.bf16.msra.mxu0 %v2367
    %2387 = vmatpush.bf16.msra.mxu0 %v2366
    %2388 = vmatpush.bf16.msra.mxu0 %v2365
    %2389 = vmatmul.bf16.gmra.mxu0 %v2329
    %v2390 = vpop.f32.mrf.mxu0
    %v2391 = vadd.f32 %v2331, %v2390
    %v2392 = vpop.f32.mrf.mxu0
    %2393 = vdwg.mxu0
    %v2394 = vmul.f32 %v2391, 0.01
    %v2395 = vmax.f32 %v2391, %v2394
    %v2396 = vld [vmem:[#allocation15] sm:$0xf]
    %v2397 = vld [vmem:[#allocation15 + $0x4] sm:$0xf]
    %v2398 = vld [vmem:[#allocation15 + $0x8] sm:$0xf]
    %v2399 = vld [vmem:[#allocation15 + $0xc] sm:$0xf]
    %v2400 = vld [vmem:[#allocation15 + $0x10] sm:$0xf]
    %v2401 = vld [vmem:[#allocation15 + $0x14] sm:$0xf]
    %v2402 = vld [vmem:[#allocation15 + $0x18] sm:$0xf]
    %v2403 = vld [vmem:[#allocation15 + $0x1c] sm:$0xf]
    %v2404 = vld [vmem:[#allocation15 + $0x20] sm:$0xf]
    %v2405 = vld [vmem:[#allocation15 + $0x24] sm:$0xf]
    %v2406 = vld [vmem:[#allocation15 + $0x28] sm:$0xf]
    %v2407 = vld [vmem:[#allocation15 + $0x2c] sm:$0xf]
    %v2408 = vld [vmem:[#allocation15 + $0x30] sm:$0xf]
    %v2409 = vld [vmem:[#allocation15 + $0x34] sm:$0xf]
    %v2410 = vld [vmem:[#allocation15 + $0x38] sm:$0xf]
    %v2411 = vld [vmem:[#allocation15 + $0x3c] sm:$0xf]
    %v2412 = vld [vmem:[%s18] sm:$0x1]
    %v2413 = vpack.c.bf16 %v2395, %v2395
    %v2415 = vperm.slane %v2412, 0
    %v2433 = vunpack.c.l.b16 %v2396
    %v2434 = vunpack.c.l.b16 %v2397
    %v2435 = vunpack.c.l.b16 %v2398
    %v2436 = vunpack.c.l.b16 %v2399
    %v2437 = vunpack.c.l.b16 %v2400
    %v2438 = vunpack.c.l.b16 %v2401
    %v2439 = vunpack.c.l.b16 %v2402
    %v2440 = vunpack.c.l.b16 %v2403
    %v2441 = vunpack.c.l.b16 %v2404
    %v2442 = vunpack.c.l.b16 %v2405
    %v2443 = vunpack.c.l.b16 %v2406
    %v2444 = vunpack.c.l.b16 %v2407
    %v2445 = vunpack.c.l.b16 %v2408
    %v2446 = vunpack.c.l.b16 %v2409
    %v2447 = vunpack.c.l.b16 %v2410
    %v2448 = vunpack.c.l.b16 %v2411
    %v2449 = vpack.c.b16 %v2434, %v2433
    %v2450 = vpack.c.b16 %v2436, %v2435
    %v2451 = vpack.c.b16 %v2438, %v2437
    %v2452 = vpack.c.b16 %v2440, %v2439
    %v2453 = vpack.c.b16 %v2442, %v2441
    %v2454 = vpack.c.b16 %v2444, %v2443
    %v2455 = vpack.c.b16 %v2446, %v2445
    %v2456 = vpack.c.b16 %v2448, %v2447
    %2465 = vmatpush.bf16.msra.mxu0 %v2456
    %2466 = vmatpush.bf16.msra.mxu0 %v2455
    %2467 = vmatpush.bf16.msra.mxu0 %v2454
    %2468 = vmatpush.bf16.msra.mxu0 %v2453
    %2469 = vmatpush.bf16.msra.mxu0 %v2452
    %2470 = vmatpush.bf16.msra.mxu0 %v2451
    %2471 = vmatpush.bf16.msra.mxu0 %v2450
    %2472 = vmatpush.bf16.msra.mxu0 %v2449
    %2473 = vmatmul.bf16.gmra.mxu0 %v2413
    %v2474 = vpop.f32.mrf.mxu0
    %v2475 = vadd.f32 %v2415, %v2474
    %v2476 = vpop.f32.mrf.mxu0
    %2477 = vdwg.mxu0
    %vm2478 = vcmask 23552
    %2479 = vst.msk [vmem:[%s19] sm:$0xff] %vm2478, %v2475
    // Predicated region
    $region114: #{tpu_custom_call.1} parent=1 // pred_check
      _
    $region115: #{tpu_custom_call.1} parent=1 // pred_check_branch
      %2481 = sbr.rel (0) target = $region117
    $region116: #{tpu_custom_call.1} parent=1 // pred_region
      _
    $region117: #{tpu_custom_call.1} parent=1 // pred_fallthru
      _
    // Predicated region
    $region118: #{tpu_custom_call.1} parent=1 // pred_check
      _
    $region119: #{tpu_custom_call.1} parent=1 // pred_check_branch
      %2483 = sbr.rel (0) target = $region121
    $region120: #{tpu_custom_call.1} parent=1 // pred_region
      _
    $region121: #{tpu_custom_call.1} parent=1 // pred_fallthru
      _
    %2484 = vsyncpa [#allocation3], 1
    %2485 = vsyncpa [#allocation5], 1
    %2486 = vsyncpa [#allocation8], 1
    %2487 = vsyncpa [#allocation11], 1
    %2488 = vsyncpa [#allocation14], 1

</llo_original>
